<compile_context>
chip_gen: v6e
topology: v6e:2x2x1
jax: 0.10.0
libtpu: 0.0.40
codegen_flags: <defaults>
</compile_context>

<pallas_src>
import functools

import jax
import jax.numpy as jnp
from jax import lax
from jax.experimental import pallas as pl
from jax.experimental.pallas import tpu as pltpu

# TODO(synk): the reference module references `self.kernel` but never defines it;
# we use a fixed multi-bandwidth Gaussian RBF kernel
#   k(a, b) = sum_bw exp(-||a - b||^2 / (2*bw)),
# and the MMD value is sum_ij k(p_i, p_j) * S_ij with S = s s^T the scale matrix.
BANDWIDTHS = (0.05, 0.2, 0.9, 4.0)


def extract_patches(x, patch_size, stride):
    """x: (b, c, h, w) -> (b, L, c*p*p); same ordering as torch unfold + transpose."""
    b, c, h, w = x.shape
    p = patch_size
    oh = (h - p) // stride + 1
    ow = (w - p) // stride + 1
    ii = (jnp.arange(oh) * stride)[:, None] + jnp.arange(p)[None, :]   # (oh, p)
    jj = (jnp.arange(ow) * stride)[:, None] + jnp.arange(p)[None, :]   # (ow, p)
    patches = x[:, :, ii]                # (b, c, oh, p, w)
    patches = patches[:, :, :, :, jj]    # (b, c, oh, p, ow, p)
    # -> (b, oh, ow, c, p_row, p_col)  == unfold's channel-major feature order
    patches = jnp.transpose(patches, (0, 2, 4, 1, 3, 5))
    return patches.reshape(b, oh * ow, c * p * p)


def _round_up(v, m):
    return ((v + m - 1) // m) * m


def _mmd_tile_kernel(pr_ref, pc_ref, o_ref, acc_ref, *, m_patches, n_patches, tile):
    """One (tile x tile) block of the pairwise patch-kernel matrix for one image pair.

    pr_ref: (tile, Dp) row block of patches; pc_ref: (tile, Dp) column block.
    acc_ref: (8, 128) f32 persistent accumulator (every element holds the running
    weighted sum); o_ref: (8, 128) lane-dense per-image output slab.
    """
    i = pl.program_id(1)
    j = pl.program_id(2)

    @pl.when((i == 0) & (j == 0))
    def _():
        acc_ref[...] = jnp.zeros_like(acc_ref)

    pr = pr_ref[...]                                          # (tile, Dp) f32
    pc = pc_ref[...]                                          # (tile, Dp) f32

    # Gram tile on the MXU.  Kept in f32: d2 via the Gram trick is
    # cancellation-sensitive and bw=0.05 amplifies small d2 errors, so the
    # bf16-cast matmul (v6e/v7x speedup) is intentionally not used.
    g = lax.dot_general(pr, pc, (((1,), (1,)), ((), ())),
                        preferred_element_type=jnp.float32)   # (tile, tile)
    sq_r = jnp.sum(pr * pr, axis=1, keepdims=True)            # (tile, 1)
    sq_c = jnp.sum(pc * pc, axis=1, keepdims=True)            # (tile, 1)
    d2 = sq_r + jnp.transpose(sq_c) - 2.0 * g                 # pairwise squared dists
    d2 = jnp.maximum(d2, 0.0)

    k = jnp.zeros_like(d2)
    for bw in BANDWIDTHS:                                     # static unroll (EUP exps)
        k = k + jnp.exp(d2 * (-1.0 / (2.0 * bw)))

    # Rank-1 scale weights generated in-kernel (the (T,T) matrix is never built):
    # +1/M for x-patch rows (global idx < M), -1/N for y-patch rows, 0 for padding.
    # (This also fixes the x/y ordering for the M != N case; identical when M == N.)
    row_idx = i * tile + lax.broadcasted_iota(jnp.int32, (tile, 1), 0)
    col_idx = j * tile + lax.broadcasted_iota(jnp.int32, (1, tile), 1)

    def scale_vec(idx):
        return jnp.where(
            idx < m_patches, 1.0 / m_patches,
            jnp.where(idx < m_patches + n_patches, -1.0 / n_patches, 0.0),
        ).astype(jnp.float32)

    partial = jnp.sum(k * (scale_vec(row_idx) * scale_vec(col_idx)))
    acc_ref[...] += jnp.full(acc_ref.shape, partial, acc_ref.dtype)

    @pl.when((i == pl.num_programs(1) - 1) & (j == pl.num_programs(2) - 1))
    def _():
        o_ref[...] = acc_ref[...]


def patch_mmd(x, y, patch_size=7, stride=1, batch_reduction='mean', tile=256):
    # TODO(synk): normalize_patch modes other than 'none' are not implemented.
    xp = extract_patches(x.astype(jnp.float32), patch_size, stride)  # (b, M, D)
    yp = extract_patches(y.astype(jnp.float32), patch_size, stride)  # (b, N, D)
    b, m_patches, d = xp.shape
    n_patches = yp.shape[1]
    t = m_patches + n_patches

    # x-patches first, then y-patches; scale weights applied accordingly in-kernel.
    all_patches = jnp.concatenate([xp, yp], axis=1)                  # (b, T, D)

    # Pad patch count to a tile multiple and feature dim to a lane multiple (128).
    # Zero feature padding leaves dot products / norms unchanged; padded patch
    # rows receive scale weight 0 inside the kernel.
    tp = _round_up(t, tile)
    dp = _round_up(d, 128)
    all_patches = jnp.pad(all_patches, ((0, 0), (0, tp - t), (0, dp - d)))

    nt = tp // tile
    kernel = functools.partial(_mmd_tile_kernel, m_patches=m_patches,
                               n_patches=n_patches, tile=tile)

    out = pl.pallas_call(
        kernel,
        out_shape=jax.ShapeDtypeStruct((b, 8, 128), jnp.float32),
        grid=(b, nt, nt),
        in_specs=[
            # row block of patches for this (i, j) tile
            pl.BlockSpec((None, tile, dp), lambda bi, i, j: (bi, i, 0)),
            # column block of patches (same array, different window)
            pl.BlockSpec((None, tile, dp), lambda bi, i, j: (bi, j, 0)),
        ],
        # lane-dense (8, 128) slab per image pair; the scalar lives at [0, 0]
        out_specs=pl.BlockSpec((None, 8, 128), lambda bi, i, j: (bi, 0, 0)),
        scratch_shapes=[pltpu.VMEM((8, 128), jnp.float32)],
        compiler_params=pltpu.CompilerParams(
            # batch axis is independent (megacore-sharded on v7x); the two tile
            # axes accumulate into the same output block -> arbitrary.
            dimension_semantics=("parallel", "arbitrary", "arbitrary")),
    )(all_patches, all_patches)

    results = out[:, 0, 0]                                           # (b,)
    if batch_reduction == 'mean':
        return results.mean()
    return results


if __name__ == "__main__":
    key = jax.random.PRNGKey(0)
    k1, k2 = jax.random.split(key)
    b, c, h, w = 2, 3, 16, 16           # -> M = N = 100 patches/image, D = 3*7*7 = 147
    x = jax.random.normal(k1, (b, c, h, w), dtype=jnp.float32)
    y = jax.random.normal(k2, (b, c, h, w), dtype=jnp.float32)

    loss = patch_mmd(x, y, patch_size=7, stride=1, batch_reduction='mean')
    jax.block_until_ready(loss)
    print("KERNEL_OK")
</pallas_src>

<mosaic_0001>
module attributes {stable_mosaic.version = 11 : i64} {
  func.func @_mmd_tile_kernel(%arg0: i32, %arg1: i32, %arg2: i32, %arg3: memref<1x256x256xf32, #tpu.memory_space<vmem>>, %arg4: memref<1x256x256xf32, #tpu.memory_space<vmem>>, %arg5: memref<1x8x128xf32, #tpu.memory_space<vmem>>, %arg6: memref<8x128xf32, #tpu.memory_space<vmem>>) attributes {dimension_semantics = [#tpu.dimension_semantics<parallel>, #tpu.dimension_semantics<arbitrary>, #tpu.dimension_semantics<arbitrary>], iteration_bounds = array<i64: 2, 1, 1>, scalar_prefetch = 0 : i64, scratch_operands = 1 : i64, tpu.core_type = #tpu.core_type<tc>, window_params = [{transform_indices = @transform_0, window_bounds = array<i64: 1, 256, 256>}, {transform_indices = @transform_1, window_bounds = array<i64: 1, 256, 256>}, {transform_indices = @transform_2, window_bounds = array<i64: 1, 8, 128>}]} {
    %c0_i32 = arith.constant 0 : i32
    %0 = arith.cmpi eq, %arg1, %c0_i32 : i32
    %c0_i32_0 = arith.constant 0 : i32
    %1 = arith.cmpi eq, %arg2, %c0_i32_0 : i32
    %2 = arith.andi %0, %1 : i1
    %3 = arith.extui %2 : i1 to i32
    %c0_i32_1 = arith.constant 0 : i32
    %4 = arith.cmpi ne, %3, %c0_i32_1 : i32
    scf.if %4 {
      %cst_33 = arith.constant 0.000000e+00 : f32
      %85 = vector.broadcast %cst_33 : f32 to vector<8x128xf32>
      %c0_34 = arith.constant 0 : index
      %c0_35 = arith.constant 0 : index
      %86 = vector.load %arg6[%c0_34, %c0_35] : memref<8x128xf32, #tpu.memory_space<vmem>>, vector<8x128xf32>
      tpu.vector_store %arg6[%c0_34, %c0_35], %85 {strides = array<i32>} : memref<8x128xf32, #tpu.memory_space<vmem>>, vector<8x128xf32>,
    } else {
    }
    %c0 = arith.constant 0 : index
    %c0_2 = arith.constant 0 : index
    %c0_3 = arith.constant 0 : index
    %5 = vector.load %arg3[%c0, %c0_2, %c0_3] : memref<1x256x256xf32, #tpu.memory_space<vmem>>, vector<1x256x256xf32>
    %6 = vector.shape_cast %5 : vector<1x256x256xf32> to vector<256x256xf32>
    %c0_4 = arith.constant 0 : index
    %c0_5 = arith.constant 0 : index
    %c0_6 = arith.constant 0 : index
    %7 = vector.load %arg4[%c0_4, %c0_5, %c0_6] : memref<1x256x256xf32, #tpu.memory_space<vmem>>, vector<1x256x256xf32>
    %8 = vector.shape_cast %7 : vector<1x256x256xf32> to vector<256x256xf32>
    %cst = arith.constant dense<0.000000e+00> : vector<256x256xf32>
    %9 = tpu.matmul %6, %8, %cst {dimension_numbers = #tpu.dot_dimension_numbers<[1], [1], [0], [0], [0, 0, 1, 0], [], []>} : vector<256x256xf32>, vector<256x256xf32>, vector<256x256xf32> -> vector<256x256xf32>
    %10 = arith.mulf %6, %6 : vector<256x256xf32>
    %cst_7 = arith.constant dense<0.000000e+00> : vector<256xf32>
    %11 = vector.multi_reduction <add>, %10, %cst_7 [1] : vector<256x256xf32> to vector<256xf32>
    %12 = vector.shape_cast %11 : vector<256xf32> to vector<256x1xf32>
    %13 = arith.mulf %8, %8 : vector<256x256xf32>
    %cst_8 = arith.constant dense<0.000000e+00> : vector<256xf32>
    %14 = vector.multi_reduction <add>, %13, %cst_8 [1] : vector<256x256xf32> to vector<256xf32>
    %15 = vector.shape_cast %14 : vector<256xf32> to vector<256x1xf32>
    %16 = tpu.transpose %15, [1, 0] : vector<256x1xf32> -> vector<1x256xf32>
    %17 = vector.broadcast %12 : vector<256x1xf32> to vector<256x256xf32>
    %18 = vector.broadcast %16 : vector<1x256xf32> to vector<256x256xf32>
    %19 = arith.addf %17, %18 : vector<256x256xf32>
    %cst_9 = arith.constant 2.000000e+00 : f32
    %20 = vector.broadcast %cst_9 : f32 to vector<256x256xf32>
    %21 = arith.mulf %20, %9 : vector<256x256xf32>
    %22 = arith.subf %19, %21 : vector<256x256xf32>
    %cst_10 = arith.constant 0.000000e+00 : f32
    %23 = vector.broadcast %cst_10 : f32 to vector<256x256xf32>
    %24 = arith.maximumf %22, %23 : vector<256x256xf32>
    %cst_11 = arith.constant 0.000000e+00 : f32
    %25 = vector.broadcast %cst_11 : f32 to vector<256x256xf32>
    %cst_12 = arith.constant -1.000000e+01 : f32
    %26 = vector.broadcast %cst_12 : f32 to vector<256x256xf32>
    %27 = arith.mulf %24, %26 : vector<256x256xf32>
    %28 = math.exp %27 : vector<256x256xf32>
    %29 = arith.addf %25, %28 : vector<256x256xf32>
    %cst_13 = arith.constant -2.500000e+00 : f32
    %30 = vector.broadcast %cst_13 : f32 to vector<256x256xf32>
    %31 = arith.mulf %24, %30 : vector<256x256xf32>
    %32 = math.exp %31 : vector<256x256xf32>
    %33 = arith.addf %29, %32 : vector<256x256xf32>
    %cst_14 = arith.constant -0.555555582 : f32
    %34 = vector.broadcast %cst_14 : f32 to vector<256x256xf32>
    %35 = arith.mulf %24, %34 : vector<256x256xf32>
    %36 = math.exp %35 : vector<256x256xf32>
    %37 = arith.addf %33, %36 : vector<256x256xf32>
    %cst_15 = arith.constant -1.250000e-01 : f32
    %38 = vector.broadcast %cst_15 : f32 to vector<256x256xf32>
    %39 = arith.mulf %24, %38 : vector<256x256xf32>
    %40 = math.exp %39 : vector<256x256xf32>
    %41 = arith.addf %37, %40 : vector<256x256xf32>
    %c256_i32 = arith.constant 256 : i32
    %42 = arith.muli %arg1, %c256_i32 : i32
    %43 = tpu.iota {dimensions = array<i32: 0>} : vector<256x1xi32>
    %44 = vector.broadcast %42 : i32 to vector<256x1xi32>
    %45 = arith.addi %44, %43 : vector<256x1xi32>
    %c256_i32_16 = arith.constant 256 : i32
    %46 = arith.muli %arg2, %c256_i32_16 : i32
    %47 = tpu.iota {dimensions = array<i32: 1>} : vector<1x256xi32>
    %48 = vector.broadcast %46 : i32 to vector<1x256xi32>
    %49 = arith.addi %48, %47 : vector<1x256xi32>
    %c100_i32 = arith.constant 100 : i32
    %50 = vector.broadcast %c100_i32 : i32 to vector<256x1xi32>
    %51 = arith.cmpi slt, %45, %50 : vector<256x1xi32>
    %c200_i32 = arith.constant 200 : i32
    %52 = vector.broadcast %c200_i32 : i32 to vector<256x1xi32>
    %53 = arith.cmpi slt, %45, %52 : vector<256x1xi32>
    %cst_17 = arith.constant -0.00999999977 : f32
    %cst_18 = arith.constant 0.000000e+00 : f32
    %54 = vector.broadcast %cst_17 : f32 to vector<256x1xf32>
    %55 = vector.broadcast %cst_18 : f32 to vector<256x1xf32>
    %56 = arith.select %53, %54, %55 : vector<256x1xi1>, vector<256x1xf32>
    %cst_19 = arith.constant 0.00999999977 : f32
    %57 = vector.broadcast %cst_19 : f32 to vector<256x1xf32>
    %58 = arith.select %51, %57, %56 : vector<256x1xi1>, vector<256x1xf32>
    %c100_i32_20 = arith.constant 100 : i32
    %59 = vector.broadcast %c100_i32_20 : i32 to vector<1x256xi32>
    %60 = arith.cmpi slt, %49, %59 : vector<1x256xi32>
    %c200_i32_21 = arith.constant 200 : i32
    %61 = vector.broadcast %c200_i32_21 : i32 to vector<1x256xi32>
    %62 = arith.cmpi slt, %49, %61 : vector<1x256xi32>
    %cst_22 = arith.constant -0.00999999977 : f32
    %cst_23 = arith.constant 0.000000e+00 : f32
    %63 = vector.broadcast %cst_22 : f32 to vector<1x256xf32>
    %64 = vector.broadcast %cst_23 : f32 to vector<1x256xf32>
    %65 = arith.select %62, %63, %64 : vector<1x256xi1>, vector<1x256xf32>
    %cst_24 = arith.constant 0.00999999977 : f32
    %66 = vector.broadcast %cst_24 : f32 to vector<1x256xf32>
    %67 = arith.select %60, %66, %65 : vector<1x256xi1>, vector<1x256xf32>
    %68 = vector.broadcast %58 : vector<256x1xf32> to vector<256x256xf32>
    %69 = vector.broadcast %67 : vector<1x256xf32> to vector<256x256xf32>
    %70 = arith.mulf %68, %69 : vector<256x256xf32>
    %71 = arith.mulf %41, %70 : vector<256x256xf32>
    %72 = vector.shape_cast %71 : vector<256x256xf32> to vector<1x256x256xf32>
    %cst_25 = arith.constant dense<0.000000e+00> : vector<1xf32>
    %73 = vector.multi_reduction <add>, %72, %cst_25 [1, 2] : vector<1x256x256xf32> to vector<1xf32>
    %74 = vector.shape_cast %73 : vector<1xf32> to vector<1x1x1xf32>
    %75 = vector.extract %74[0, 0, 0] : f32 from vector<1x1x1xf32>
    %c0_26 = arith.constant 0 : index
    %c0_27 = arith.constant 0 : index
    %76 = vector.load %arg6[%c0_26, %c0_27] : memref<8x128xf32, #tpu.memory_space<vmem>>, vector<8x128xf32>
    %77 = vector.broadcast %75 : f32 to vector<8x128xf32>
    %78 = arith.addf %76, %77 : vector<8x128xf32>
    %c0_28 = arith.constant 0 : index
    %c0_29 = arith.constant 0 : index
    %79 = vector.load %arg6[%c0_28, %c0_29] : memref<8x128xf32, #tpu.memory_space<vmem>>, vector<8x128xf32>
    tpu.vector_store %arg6[%c0_28, %c0_29], %78 {strides = array<i32>} : memref<8x128xf32, #tpu.memory_space<vmem>>, vector<8x128xf32>,
    %c0_i32_30 = arith.constant 0 : i32
    %80 = arith.cmpi eq, %arg1, %c0_i32_30 : i32
    %c0_i32_31 = arith.constant 0 : i32
    %81 = arith.cmpi eq, %arg2, %c0_i32_31 : i32
    %82 = arith.andi %80, %81 : i1
    %83 = arith.extui %82 : i1 to i32
    %c0_i32_32 = arith.constant 0 : i32
    %84 = arith.cmpi ne, %83, %c0_i32_32 : i32
    scf.if %84 {
      %c0_33 = arith.constant 0 : index
      %c0_34 = arith.constant 0 : index
      %85 = vector.load %arg6[%c0_33, %c0_34] : memref<8x128xf32, #tpu.memory_space<vmem>>, vector<8x128xf32>
      %c0_35 = arith.constant 0 : index
      %c0_36 = arith.constant 0 : index
      %c0_37 = arith.constant 0 : index
      %86 = vector.load %arg5[%c0_35, %c0_36, %c0_37] : memref<1x8x128xf32, #tpu.memory_space<vmem>>, vector<1x8x128xf32>
      %87 = vector.shape_cast %86 : vector<1x8x128xf32> to vector<8x128xf32>
      %88 = vector.shape_cast %85 : vector<8x128xf32> to vector<1x8x128xf32>
      tpu.vector_store %arg5[%c0_35, %c0_36, %c0_37], %88 {strides = array<i32>} : memref<1x8x128xf32, #tpu.memory_space<vmem>>, vector<1x8x128xf32>,
    } else {
    }
    return
  }
  func.func @transform_0(%arg0: i32, %arg1: i32, %arg2: i32) -> (i32, i32, i32) {
    %c0_i32 = arith.constant 0 : i32
    %c0_i32_0 = arith.constant 0 : i32
    return %arg0, %arg1, %c0_i32 : i32, i32, i32
  }
  func.func @transform_1(%arg0: i32, %arg1: i32, %arg2: i32) -> (i32, i32, i32) {
    %c0_i32 = arith.constant 0 : i32
    %c0_i32_0 = arith.constant 0 : i32
    return %arg0, %arg2, %c0_i32 : i32, i32, i32
  }
  func.func @transform_2(%arg0: i32, %arg1: i32, %arg2: i32) -> (i32, i32, i32) {
    %c0_i32 = arith.constant 0 : i32
    %c0_i32_0 = arith.constant 0 : i32
    %c0_i32_1 = arith.constant 0 : i32
    return %arg0, %c0_i32, %c0_i32_0 : i32, i32, i32
  }
}

</mosaic_0001>

<llo_original>
// kernel: tpu_custom_call.1
$region0: #{tpu_custom_call.1}
  #allocation0 [shape = 'u32[]', space=smem, size = 0x4, offset = 0x4, fixed_abs, tag = 'smem constant byte address 0x4 - core index']
  #allocation1 [shape = 'u32[144,128]{1,0:T(1,128)}', space=vmem, size = 0x12000, scoped, tag = 'internal scratch']
  #allocation2 [shape = 'f32[8,128]{1,0:T(8,128)}', space=vmem, size = 0x1000, scoped, tag = 'scratch operand']
  %s0 = inlined_call_operand.hbm [shape: f32[2,256,256], index: 0, kind: input, shape index: {}]
  %s1 = inlined_call_operand.hbm [shape: f32[2,256,256], index: 1, kind: input, shape index: {}]
  %s2 = inlined_call_operand.hbm [shape: f32[2,8,128], index: 2, kind: output, shape index: {}]
  %s3 = sld [smem:[#allocation0]]
  $region57: #{tpu_custom_call.1} parent=0
    _
  %s5 = ssub.s32 1, %s3
  %s6 = scalar_select 0, %s5, %s3
  $region1: #{tpu_custom_call.1} parent=0
    #allocation3 [shape = 'u8[524288]{0}', space=vmem, size = 0x80000, scoped, tag = 'input window, operand 0']
    #allocation4 [shape = 's32[2]{0}', space=sflag, size = 0x8, scoped, tag = 'scoped memory for tpu_custom_call.1']
    #allocation5 [shape = 's32[2]{0}', space=sflag, size = 0x8, scoped, tag = 'scoped memory for tpu_custom_call.1']
    #allocation6 [shape = 'u8[524288]{0}', space=vmem, size = 0x80000, scoped, tag = 'input window, operand 1']
    #allocation7 [shape = 's32[2]{0}', space=sflag, size = 0x8, scoped, tag = 'scoped memory for tpu_custom_call.1']
    #allocation8 [shape = 'u8[8192]{0}', space=vmem, size = 0x2000, scoped, tag = 'output window, operand 0']
    %7 = vsyncpa [#allocation4], 0
    %s8 = scalar_lea.sflag [#allocation4], 1
    %9 = vsyncpa %s8, 0
    %10 = vsyncpa [#allocation7], 0
    %s11 = scalar_lea.sflag [#allocation7], 1
    %12 = vsyncpa %s11, 0
    %13 = vsyncpa [#allocation5], 0
    %s14 = scalar_lea.sflag [#allocation5], 1
    %15 = vsyncpa %s14, 0
    loop: start=0, step=1, limit=4
    $region2: #{tpu_custom_call.1} parent=1 // loop_pre_header
      _
    $region3: #{tpu_custom_call.1} parent=1 // loop_header
      %s17 = sphi 0, %s21
      %p18 = scmp.ge.s32.totalorder %s17, 4
      %s24 = sphi 0, %s43
      %s25 = sphi 0, %s39
      %s26 = sphi 0, %s35
      %s27 = sphi 0, %s24
      %s28 = sphi 0, %s25
      %s29 = sphi 0, %s26
      %s30 = sphi 0, %s27
      %s31 = sphi 0, %s28
      %s32 = sphi 0, %s29
      %s48 = sphi 0, %s50
      %s51 = sphi 0, %s48
      %s52 = sphi 0, %s51
      %s68 = sphi 0, %s52
      %s76 = sphi 0, %s78
      %s79 = sphi 0, %s76
      %s80 = sphi 0, %s79
      %s96 = sphi 0, %s80
      %s102 = sphi 0, %s104
      %s105 = sphi 0, %s102
      %s106 = sphi 0, %s105
      %s122 = sphi 0, %s106
    $region4: #{tpu_custom_call.1} parent=1 // loop_header_branch
      %20 = sbr.rel (%p18) target = $region8
    $region5: #{tpu_custom_call.1} parent=1 // loop_body
      %s22 = ssub.s32 %s17, 1
      %s23 = ssub.s32 %s17, 2
      %s33 = sadd.s32 1, %s26
      %p34 = scmp.ge.s32.totalorder %s33, 1
      %s35 = scalar_select %p34, 0, %s33
      %s36 = sadd.s32 1, %s25
      %s37 = scalar_select %p34, %s36, %s25
      %p38 = scmp.ge.s32.totalorder %s37, 1
      %s39 = scalar_select %p38, 0, %s37
      %s40 = sadd.s32 1, %s24
      %s41 = scalar_select %p38, %s40, %s24
      %p42 = scmp.ge.s32.totalorder %s41, 2
      %s43 = scalar_select %p42, 0, %s41
      %s44 = ssub.s32 %s24, %s43
      %s45 = ssub.s32 %s25, %s39
      %s46 = sor.u32 %s44, %s45
      %p47 = scmp.eq.s32.totalorder %s46, 0
      %s49 = sadd.s32 %s48, 1
      %s50 = scalar_select %p47, %s48, %s49
      %p53 = pneg %p47
      %p54 = scmp.eq.s32.totalorder %s17, 1
      %p55 = por %p53, %p54
      %p56 = scmp.ne.s32.totalorder %s48, %s51
      %p57 = scmp.eq.s32.totalorder %s17, 0
      %p58 = por %p56, %p57
      %p59 = scmp.ne.s32.totalorder %s48, %s51
      %p60 = scmp.eq.s32.totalorder %s22, 1
      %p61 = por %p59, %p60
      %p62 = scmp.ne.s32.totalorder %s51, %s52
      %p63 = scmp.eq.s32.totalorder %s22, 0
      %p64 = por %p62, %p63
      %p65 = scmp.ne.s32.totalorder %s51, %s52
      %p66 = scmp.eq.s32.totalorder %s23, 1
      %p67 = por %p65, %p66
      %p69 = scmp.ne.s32.totalorder %s52, %s68
      %p70 = scmp.eq.s32.totalorder %s23, 0
      %p71 = por %p69, %p70
      %s72 = ssub.s32 %s24, %s43
      %s73 = ssub.s32 %s26, %s35
      %s74 = sor.u32 %s72, %s73
      %p75 = scmp.eq.s32.totalorder %s74, 0
      %s77 = sadd.s32 %s76, 1
      %s78 = scalar_select %p75, %s76, %s77
      %p81 = pneg %p75
      %p82 = scmp.eq.s32.totalorder %s17, 1
      %p83 = por %p81, %p82
      %p84 = scmp.ne.s32.totalorder %s76, %s79
      %p85 = scmp.eq.s32.totalorder %s17, 0
      %p86 = por %p84, %p85
      %p87 = scmp.ne.s32.totalorder %s76, %s79
      %p88 = scmp.eq.s32.totalorder %s22, 1
      %p89 = por %p87, %p88
      %p90 = scmp.ne.s32.totalorder %s79, %s80
      %p91 = scmp.eq.s32.totalorder %s22, 0
      %p92 = por %p90, %p91
      %p93 = scmp.ne.s32.totalorder %s79, %s80
      %p94 = scmp.eq.s32.totalorder %s23, 1
      %p95 = por %p93, %p94
      %p97 = scmp.ne.s32.totalorder %s80, %s96
      %p98 = scmp.eq.s32.totalorder %s23, 0
      %p99 = por %p97, %p98
      %s100 = ssub.s32 %s24, %s43
      %p101 = scmp.eq.s32.totalorder %s100, 0
      %s103 = sadd.s32 %s102, 1
      %s104 = scalar_select %p101, %s102, %s103
      %p107 = pneg %p101
      %p108 = scmp.eq.s32.totalorder %s17, 1
      %p109 = por %p107, %p108
      %p110 = scmp.ne.s32.totalorder %s102, %s105
      %p111 = scmp.eq.s32.totalorder %s17, 0
      %p112 = por %p110, %p111
      %p113 = scmp.ne.s32.totalorder %s102, %s105
      %p114 = scmp.eq.s32.totalorder %s22, 1
      %p115 = por %p113, %p114
      %p116 = scmp.ne.s32.totalorder %s105, %s106
      %p117 = scmp.eq.s32.totalorder %s22, 0
      %p118 = por %p116, %p117
      %p119 = scmp.ne.s32.totalorder %s105, %s106
      %p120 = scmp.eq.s32.totalorder %s23, 1
      %p121 = por %p119, %p120
      %p123 = scmp.ne.s32.totalorder %s106, %s122
      %p124 = scmp.eq.s32.totalorder %s23, 0
      %p125 = por %p123, %p124
      %p126 = scmp.le.s32.totalorder 1, %s17
      %p127 = scmp.lt.s32.totalorder %s17, 3
      %p128 = pnand %p126, %p127
      %p129 = pneg %p128
      // Predicated region
      $region9: #{tpu_custom_call.1} parent=5 // pred_check
        _
      $region10: #{tpu_custom_call.1} parent=5 // pred_check_branch
        %131 = sbr.rel (%p128) target = $region12
      $region11: #{tpu_custom_call.1} parent=5 // pred_region
        %s132 = ssub.s32 %s17, 1
      $region12: #{tpu_custom_call.1} parent=5 // pred_fallthru
        _
      %p133 = scmp.lt.s32.totalorder %s17, 2
      // Predicated region
      $region13: #{tpu_custom_call.1} parent=5 // pred_check
        %p134 = pneg %p133
      $region14: #{tpu_custom_call.1} parent=5 // pred_check_branch
        %136 = sbr.rel (%p134) target = $region16
      $region15: #{tpu_custom_call.1} parent=5 // pred_region
        // Predicated region
        $region17: #{tpu_custom_call.1} parent=15 // pred_check
          %p137 = pneg %p58
        $region18: #{tpu_custom_call.1} parent=15 // pred_check_branch
          %139 = sbr.rel (%p137) target = $region20
        $region19: #{tpu_custom_call.1} parent=15 // pred_region
          %s140 = sand.u32 %s48, 1
          %s141 = scalar_lea.sflag [#allocation4], %s140
          %s142 = sand.u32 %s48, 1
          %s143 = smul.addr %s142, 512
          %s144 = scalar_lea.vmem [#allocation3], %s143
          %s145 = smul.u32 32, %s25
          %s147 = ssub.s32 8192, 8192
          %148 = vsyncadd %s141, %s147
          %s149 = smul.addr %s145, 2
          %s150 = smul.addr %s24, 64
          %s151 = sadd.s32 %s149, %s150
          %s152 = smul.addr %s151, 128
          %s153 = scalar_lea.hbm %s0, %s152
          %s154 = sshll.u32 %s144, 4
          %s155 = int_to_ptr.vmem [resolvable:$true] %s154
          %160 = dma.hbm_to_vmem [thread:$0]  %s153, 8192, %s155, %s141, 256, 256, 16
        $region20: #{tpu_custom_call.1} parent=15 // pred_fallthru
          _
        // Predicated region
        $region21: #{tpu_custom_call.1} parent=15 // pred_check
          %p161 = pneg %p86
        $region22: #{tpu_custom_call.1} parent=15 // pred_check_branch
          %163 = sbr.rel (%p161) target = $region24
        $region23: #{tpu_custom_call.1} parent=15 // pred_region
          %s164 = sand.u32 %s76, 1
          %s165 = scalar_lea.sflag [#allocation7], %s164
          %s166 = sand.u32 %s76, 1
          %s167 = smul.addr %s166, 512
          %s168 = scalar_lea.vmem [#allocation6], %s167
          %s169 = smul.u32 32, %s26
          %s171 = ssub.s32 8192, 8192
          %172 = vsyncadd %s165, %s171
          %s173 = smul.addr %s169, 2
          %s174 = smul.addr %s24, 64
          %s175 = sadd.s32 %s173, %s174
          %s176 = smul.addr %s175, 128
          %s177 = scalar_lea.hbm %s1, %s176
          %s178 = sshll.u32 %s168, 4
          %s179 = int_to_ptr.vmem [resolvable:$true] %s178
          %184 = dma.hbm_to_vmem [thread:$0]  %s177, 8192, %s179, %s165, 256, 256, 16
        $region24: #{tpu_custom_call.1} parent=15 // pred_fallthru
          _
      $region16: #{tpu_custom_call.1} parent=5 // pred_fallthru
        _
      %p185 = scmp.le.s32.totalorder 1, %s17
      %p186 = scmp.lt.s32.totalorder %s17, 3
      %p187 = pnand %p185, %p186
      %p188 = pneg %p187
      // Predicated region
      $region25: #{tpu_custom_call.1} parent=5 // pred_check
        _
      $region26: #{tpu_custom_call.1} parent=5 // pred_check_branch
        %190 = sbr.rel (%p187) target = $region28
      $region27: #{tpu_custom_call.1} parent=5 // pred_region
        %s191 = ssub.s32 %s17, 1
        %s192 = sand.u32 %s51, 1
        %s193 = scalar_lea.sflag [#allocation4], %s192
        %s194 = sand.u32 %s51, 1
        %s195 = smul.addr %s194, 512
        %s196 = scalar_lea.vmem [#allocation3], %s195
        // Predicated region
        $region29: #{tpu_custom_call.1} parent=27 // pred_check
          %p197 = pneg %p64
        $region30: #{tpu_custom_call.1} parent=27 // pred_check_branch
          %199 = sbr.rel (%p197) target = $region32
        $region31: #{tpu_custom_call.1} parent=27 // pred_region
          %200 = dma.done %s193, 8192
        $region32: #{tpu_custom_call.1} parent=27 // pred_fallthru
          _
        %s201 = sand.u32 %s79, 1
        %s202 = scalar_lea.sflag [#allocation7], %s201
        %s203 = sand.u32 %s79, 1
        %s204 = smul.addr %s203, 512
        %s205 = scalar_lea.vmem [#allocation6], %s204
        // Predicated region
        $region33: #{tpu_custom_call.1} parent=27 // pred_check
          %p206 = pneg %p92
        $region34: #{tpu_custom_call.1} parent=27 // pred_check_branch
          %208 = sbr.rel (%p206) target = $region36
        $region35: #{tpu_custom_call.1} parent=27 // pred_region
          %209 = dma.done %s202, 8192
        $region36: #{tpu_custom_call.1} parent=27 // pred_fallthru
          _
        %s210 = sand.u32 %s51, 1
        %s211 = scalar_lea.sflag [#allocation4], %s210
        %s212 = sand.u32 %s51, 1
        %s213 = smul.addr %s212, 512
        %s214 = scalar_lea.vmem [#allocation3], %s213
        %p215 = pneg %p64
        %p216 = pneg %p61
        %s217 = sand.u32 %s79, 1
        %s218 = scalar_lea.sflag [#allocation7], %s217
        %s219 = sand.u32 %s79, 1
        %s220 = smul.addr %s219, 512
        %s221 = scalar_lea.vmem [#allocation6], %s220
        %p222 = pneg %p92
        %p223 = pneg %p89
        %p224 = pneg %p118
        %p225 = pneg %p115
        %s226 = sand.u32 %s105, 1
        %s227 = scalar_lea.sflag [#allocation5], %s226
        %s228 = sand.u32 %s105, 1
        %s229 = smul.addr %s228, 8
        %s230 = scalar_lea.vmem [#allocation8], %s229
        %s231 = smul.u32 32, %s28
        %s232 = smul.u32 32, %s29
        %p233 = scmp.eq.s32.totalorder %s28, 0
        %p234 = scmp.eq.s32.totalorder %s29, 0
        %p235 = pnand %p233, %p234
        %p236 = pneg %p235
        // Predicated region
        $region37: #{tpu_custom_call.1} parent=27 // pred_check
          _
        $region38: #{tpu_custom_call.1} parent=27 // pred_check_branch
          %238 = sbr.rel (%p235) target = $region40
        $region39: #{tpu_custom_call.1} parent=27 // pred_region
          %239 = vst [vmem:[#allocation2] sm:$0xff] 0.0
        $region40: #{tpu_custom_call.1} parent=27 // pred_fallthru
          _
        %v240 = vld [vmem:[%s196] sm:$0xff]
        %v241 = vld [vmem:[%s196 + $0x8] sm:$0xff]
        %v242 = vld [vmem:[%s196 + $0x10] sm:$0xff]
        %v243 = vld [vmem:[%s196 + $0x18] sm:$0xff]
        %v244 = vld [vmem:[%s196 + $0x20] sm:$0xff]
        %v245 = vld [vmem:[%s196 + $0x28] sm:$0xff]
        %v246 = vld [vmem:[%s196 + $0x30] sm:$0xff]
        %v247 = vld [vmem:[%s196 + $0x38] sm:$0xff]
        %v248 = vld [vmem:[%s196 + $0x40] sm:$0xff]
        %v249 = vld [vmem:[%s196 + $0x48] sm:$0xff]
        %v250 = vld [vmem:[%s196 + $0x50] sm:$0xff]
        %v251 = vld [vmem:[%s196 + $0x58] sm:$0xff]
        %v252 = vld [vmem:[%s196 + $0x60] sm:$0xff]
        %v253 = vld [vmem:[%s196 + $0x68] sm:$0xff]
        %v254 = vld [vmem:[%s196 + $0x70] sm:$0xff]
        %v255 = vld [vmem:[%s196 + $0x78] sm:$0xff]
        %v256 = vld [vmem:[%s196 + $0x80] sm:$0xff]
        %v257 = vld [vmem:[%s196 + $0x88] sm:$0xff]
        %v258 = vld [vmem:[%s196 + $0x90] sm:$0xff]
        %v259 = vld [vmem:[%s196 + $0x98] sm:$0xff]
        %v260 = vld [vmem:[%s196 + $0xa0] sm:$0xff]
        %v261 = vld [vmem:[%s196 + $0xa8] sm:$0xff]
        %v262 = vld [vmem:[%s196 + $0xb0] sm:$0xff]
        %v263 = vld [vmem:[%s196 + $0xb8] sm:$0xff]
        %v264 = vld [vmem:[%s196 + $0xc0] sm:$0xff]
        %v265 = vld [vmem:[%s196 + $0xc8] sm:$0xff]
        %v266 = vld [vmem:[%s196 + $0xd0] sm:$0xff]
        %v267 = vld [vmem:[%s196 + $0xd8] sm:$0xff]
        %v268 = vld [vmem:[%s196 + $0xe0] sm:$0xff]
        %v269 = vld [vmem:[%s196 + $0xe8] sm:$0xff]
        %v270 = vld [vmem:[%s196 + $0xf0] sm:$0xff]
        %v271 = vld [vmem:[%s196 + $0xf8] sm:$0xff]
        %v272 = vld [vmem:[%s196 + $0x100] sm:$0xff]
        %v273 = vld [vmem:[%s196 + $0x108] sm:$0xff]
        %v274 = vld [vmem:[%s196 + $0x110] sm:$0xff]
        %v275 = vld [vmem:[%s196 + $0x118] sm:$0xff]
        %v276 = vld [vmem:[%s196 + $0x120] sm:$0xff]
        %v277 = vld [vmem:[%s196 + $0x128] sm:$0xff]
        %v278 = vld [vmem:[%s196 + $0x130] sm:$0xff]
        %v279 = vld [vmem:[%s196 + $0x138] sm:$0xff]
        %v280 = vld [vmem:[%s196 + $0x140] sm:$0xff]
        %v281 = vld [vmem:[%s196 + $0x148] sm:$0xff]
        %v282 = vld [vmem:[%s196 + $0x150] sm:$0xff]
        %v283 = vld [vmem:[%s196 + $0x158] sm:$0xff]
        %v284 = vld [vmem:[%s196 + $0x160] sm:$0xff]
        %v285 = vld [vmem:[%s196 + $0x168] sm:$0xff]
        %v286 = vld [vmem:[%s196 + $0x170] sm:$0xff]
        %v287 = vld [vmem:[%s196 + $0x178] sm:$0xff]
        %v288 = vld [vmem:[%s196 + $0x180] sm:$0xff]
        %v289 = vld [vmem:[%s196 + $0x188] sm:$0xff]
        %v290 = vld [vmem:[%s196 + $0x190] sm:$0xff]
        %v291 = vld [vmem:[%s196 + $0x198] sm:$0xff]
        %v292 = vld [vmem:[%s196 + $0x1a0] sm:$0xff]
        %v293 = vld [vmem:[%s196 + $0x1a8] sm:$0xff]
        %v294 = vld [vmem:[%s196 + $0x1b0] sm:$0xff]
        %v295 = vld [vmem:[%s196 + $0x1b8] sm:$0xff]
        %v296 = vld [vmem:[%s196 + $0x1c0] sm:$0xff]
        %v297 = vld [vmem:[%s196 + $0x1c8] sm:$0xff]
        %v298 = vld [vmem:[%s196 + $0x1d0] sm:$0xff]
        %v299 = vld [vmem:[%s196 + $0x1d8] sm:$0xff]
        %v300 = vld [vmem:[%s196 + $0x1e0] sm:$0xff]
        %v301 = vld [vmem:[%s196 + $0x1e8] sm:$0xff]
        %v302 = vld [vmem:[%s196 + $0x1f0] sm:$0xff]
        %v303 = vld [vmem:[%s196 + $0x1f8] sm:$0xff]
        %v304 = vld [vmem:[%s205] sm:$0xff]
        %v305 = vld [vmem:[%s205 + $0x8] sm:$0xff]
        %v306 = vld [vmem:[%s205 + $0x10] sm:$0xff]
        %v307 = vld [vmem:[%s205 + $0x18] sm:$0xff]
        %v308 = vld [vmem:[%s205 + $0x20] sm:$0xff]
        %v309 = vld [vmem:[%s205 + $0x28] sm:$0xff]
        %v310 = vld [vmem:[%s205 + $0x30] sm:$0xff]
        %v311 = vld [vmem:[%s205 + $0x38] sm:$0xff]
        %v312 = vld [vmem:[%s205 + $0x40] sm:$0xff]
        %v313 = vld [vmem:[%s205 + $0x48] sm:$0xff]
        %v314 = vld [vmem:[%s205 + $0x50] sm:$0xff]
        %v315 = vld [vmem:[%s205 + $0x58] sm:$0xff]
        %v316 = vld [vmem:[%s205 + $0x60] sm:$0xff]
        %v317 = vld [vmem:[%s205 + $0x68] sm:$0xff]
        %v318 = vld [vmem:[%s205 + $0x70] sm:$0xff]
        %v319 = vld [vmem:[%s205 + $0x78] sm:$0xff]
        %v320 = vld [vmem:[%s205 + $0x80] sm:$0xff]
        %v321 = vld [vmem:[%s205 + $0x88] sm:$0xff]
        %v322 = vld [vmem:[%s205 + $0x90] sm:$0xff]
        %v323 = vld [vmem:[%s205 + $0x98] sm:$0xff]
        %v324 = vld [vmem:[%s205 + $0xa0] sm:$0xff]
        %v325 = vld [vmem:[%s205 + $0xa8] sm:$0xff]
        %v326 = vld [vmem:[%s205 + $0xb0] sm:$0xff]
        %v327 = vld [vmem:[%s205 + $0xb8] sm:$0xff]
        %v328 = vld [vmem:[%s205 + $0xc0] sm:$0xff]
        %v329 = vld [vmem:[%s205 + $0xc8] sm:$0xff]
        %v330 = vld [vmem:[%s205 + $0xd0] sm:$0xff]
        %v331 = vld [vmem:[%s205 + $0xd8] sm:$0xff]
        %v332 = vld [vmem:[%s205 + $0xe0] sm:$0xff]
        %v333 = vld [vmem:[%s205 + $0xe8] sm:$0xff]
        %v334 = vld [vmem:[%s205 + $0xf0] sm:$0xff]
        %v335 = vld [vmem:[%s205 + $0xf8] sm:$0xff]
        %v336 = vld [vmem:[%s205 + $0x100] sm:$0xff]
        %v337 = vld [vmem:[%s205 + $0x108] sm:$0xff]
        %v338 = vld [vmem:[%s205 + $0x110] sm:$0xff]
        %v339 = vld [vmem:[%s205 + $0x118] sm:$0xff]
        %v340 = vld [vmem:[%s205 + $0x120] sm:$0xff]
        %v341 = vld [vmem:[%s205 + $0x128] sm:$0xff]
        %v342 = vld [vmem:[%s205 + $0x130] sm:$0xff]
        %v343 = vld [vmem:[%s205 + $0x138] sm:$0xff]
        %v344 = vld [vmem:[%s205 + $0x140] sm:$0xff]
        %v345 = vld [vmem:[%s205 + $0x148] sm:$0xff]
        %v346 = vld [vmem:[%s205 + $0x150] sm:$0xff]
        %v347 = vld [vmem:[%s205 + $0x158] sm:$0xff]
        %v348 = vld [vmem:[%s205 + $0x160] sm:$0xff]
        %v349 = vld [vmem:[%s205 + $0x168] sm:$0xff]
        %v350 = vld [vmem:[%s205 + $0x170] sm:$0xff]
        %v351 = vld [vmem:[%s205 + $0x178] sm:$0xff]
        %v352 = vld [vmem:[%s205 + $0x180] sm:$0xff]
        %v353 = vld [vmem:[%s205 + $0x188] sm:$0xff]
        %v354 = vld [vmem:[%s205 + $0x190] sm:$0xff]
        %v355 = vld [vmem:[%s205 + $0x198] sm:$0xff]
        %v356 = vld [vmem:[%s205 + $0x1a0] sm:$0xff]
        %v357 = vld [vmem:[%s205 + $0x1a8] sm:$0xff]
        %v358 = vld [vmem:[%s205 + $0x1b0] sm:$0xff]
        %v359 = vld [vmem:[%s205 + $0x1b8] sm:$0xff]
        %v360 = vld [vmem:[%s205 + $0x1c0] sm:$0xff]
        %v361 = vld [vmem:[%s205 + $0x1c8] sm:$0xff]
        %v362 = vld [vmem:[%s205 + $0x1d0] sm:$0xff]
        %v363 = vld [vmem:[%s205 + $0x1d8] sm:$0xff]
        %v364 = vld [vmem:[%s205 + $0x1e0] sm:$0xff]
        %v365 = vld [vmem:[%s205 + $0x1e8] sm:$0xff]
        %v366 = vld [vmem:[%s205 + $0x1f0] sm:$0xff]
        %v367 = vld [vmem:[%s205 + $0x1f8] sm:$0xff]
        %368 = vmatprep.subr.mxu0 %v335
        %369 = vmatpush1.xpose.msra.mxu0 %v334
        %370 = vmatprep.subr.mxu0 %v333
        %371 = vmatpush1.xpose.msra.mxu0 %v332
        %372 = vmatprep.subr.mxu0 %v331
        %373 = vmatpush1.xpose.msra.mxu0 %v330
        %374 = vmatprep.subr.mxu0 %v329
        %375 = vmatpush1.xpose.msra.mxu0 %v328
        %376 = vmatprep.subr.mxu0 %v327
        %377 = vmatpush1.xpose.msra.mxu0 %v326
        %378 = vmatprep.subr.mxu0 %v325
        %379 = vmatpush1.xpose.msra.mxu0 %v324
        %380 = vmatprep.subr.mxu0 %v323
        %381 = vmatpush1.xpose.msra.mxu0 %v322
        %382 = vmatprep.subr.mxu0 %v321
        %383 = vmatpush1.xpose.msra.mxu0 %v320
        %384 = vmatprep.subr.mxu0 %v319
        %385 = vmatpush1.xpose.msra.mxu0 %v318
        %386 = vmatprep.subr.mxu0 %v317
        %387 = vmatpush1.xpose.msra.mxu0 %v316
        %388 = vmatprep.subr.mxu0 %v315
        %389 = vmatpush1.xpose.msra.mxu0 %v314
        %390 = vmatprep.subr.mxu0 %v313
        %391 = vmatpush1.xpose.msra.mxu0 %v312
        %392 = vmatprep.subr.mxu0 %v311
        %393 = vmatpush1.xpose.msra.mxu0 %v310
        %394 = vmatprep.subr.mxu0 %v309
        %395 = vmatpush1.xpose.msra.mxu0 %v308
        %396 = vmatprep.subr.mxu0 %v307
        %397 = vmatpush1.xpose.msra.mxu0 %v306
        %398 = vmatprep.subr.mxu0 %v305
        %399 = vmatpush1.xpose.msra.mxu0 %v304
        %400 = vmatprep.subr.mxu0 %v367
        %401 = vmatpush2.xpose.msra.mxu0 %v366
        %402 = vmatprep.subr.mxu0 %v365
        %403 = vmatpush2.xpose.msra.mxu0 %v364
        %404 = vmatprep.subr.mxu0 %v363
        %405 = vmatpush2.xpose.msra.mxu0 %v362
        %406 = vmatprep.subr.mxu0 %v361
        %407 = vmatpush2.xpose.msra.mxu0 %v360
        %408 = vmatprep.subr.mxu0 %v359
        %409 = vmatpush2.xpose.msra.mxu0 %v358
        %410 = vmatprep.subr.mxu0 %v357
        %411 = vmatpush2.xpose.msra.mxu0 %v356
        %412 = vmatprep.subr.mxu0 %v355
        %413 = vmatpush2.xpose.msra.mxu0 %v354
        %414 = vmatprep.subr.mxu0 %v353
        %415 = vmatpush2.xpose.msra.mxu0 %v352
        %416 = vmatprep.subr.mxu0 %v351
        %417 = vmatpush2.xpose.msra.mxu0 %v350
        %418 = vmatprep.subr.mxu0 %v349
        %419 = vmatpush2.xpose.msra.mxu0 %v348
        %420 = vmatprep.subr.mxu0 %v347
        %421 = vmatpush2.xpose.msra.mxu0 %v346
        %422 = vmatprep.subr.mxu0 %v345
        %423 = vmatpush2.xpose.msra.mxu0 %v344
        %424 = vmatprep.subr.mxu0 %v343
        %425 = vmatpush2.xpose.msra.mxu0 %v342
        %426 = vmatprep.subr.mxu0 %v341
        %427 = vmatpush2.xpose.msra.mxu0 %v340
        %428 = vmatprep.subr.mxu0 %v339
        %429 = vmatpush2.xpose.msra.mxu0 %v338
        %430 = vmatprep.subr.mxu0 %v337
        %431 = vmatpush2.xpose.msra.mxu0 %v336
        %432 = vmatprep.mubr.f32.mxu0 %v241
        %433 = vmatmul.mubr.f32.gmra.mxu0 %v240
        %v434 = vpop.f32.mrf.mxu0
        %v435 = vadd.f32 0.0, %v434
        %v436 = vpop.f32.mrf.mxu0
        %v437 = vadd.f32 0.0, %v436
        %438 = vmatprep.mubr.f32.mxu0 %v243
        %439 = vmatmul.mubr.f32.gmra.mxu0 %v242
        %v440 = vpop.f32.mrf.mxu0
        %v441 = vadd.f32 0.0, %v440
        %v442 = vpop.f32.mrf.mxu0
        %v443 = vadd.f32 0.0, %v442
        %444 = vmatprep.mubr.f32.mxu0 %v245
        %445 = vmatmul.mubr.f32.gmra.mxu0 %v244
        %v446 = vpop.f32.mrf.mxu0
        %v447 = vadd.f32 0.0, %v446
        %v448 = vpop.f32.mrf.mxu0
        %v449 = vadd.f32 0.0, %v448
        %450 = vmatprep.mubr.f32.mxu0 %v247
        %451 = vmatmul.mubr.f32.gmra.mxu0 %v246
        %v452 = vpop.f32.mrf.mxu0
        %v453 = vadd.f32 0.0, %v452
        %v454 = vpop.f32.mrf.mxu0
        %v455 = vadd.f32 0.0, %v454
        %456 = vmatprep.mubr.f32.mxu0 %v249
        %457 = vmatmul.mubr.f32.gmra.mxu0 %v248
        %v458 = vpop.f32.mrf.mxu0
        %v459 = vadd.f32 0.0, %v458
        %v460 = vpop.f32.mrf.mxu0
        %v461 = vadd.f32 0.0, %v460
        %462 = vmatprep.mubr.f32.mxu0 %v251
        %463 = vmatmul.mubr.f32.gmra.mxu0 %v250
        %v464 = vpop.f32.mrf.mxu0
        %v465 = vadd.f32 0.0, %v464
        %v466 = vpop.f32.mrf.mxu0
        %v467 = vadd.f32 0.0, %v466
        %468 = vmatprep.mubr.f32.mxu0 %v253
        %469 = vmatmul.mubr.f32.gmra.mxu0 %v252
        %v470 = vpop.f32.mrf.mxu0
        %v471 = vadd.f32 0.0, %v470
        %v472 = vpop.f32.mrf.mxu0
        %v473 = vadd.f32 0.0, %v472
        %474 = vmatprep.mubr.f32.mxu0 %v255
        %475 = vmatmul.mubr.f32.gmra.mxu0 %v254
        %v476 = vpop.f32.mrf.mxu0
        %v477 = vadd.f32 0.0, %v476
        %v478 = vpop.f32.mrf.mxu0
        %v479 = vadd.f32 0.0, %v478
        %480 = vmatprep.mubr.f32.mxu0 %v257
        %481 = vmatmul.mubr.f32.gmra.mxu0 %v256
        %v482 = vpop.f32.mrf.mxu0
        %v483 = vadd.f32 0.0, %v482
        %v484 = vpop.f32.mrf.mxu0
        %v485 = vadd.f32 0.0, %v484
        %486 = vmatprep.mubr.f32.mxu0 %v259
        %487 = vmatmul.mubr.f32.gmra.mxu0 %v258
        %v488 = vpop.f32.mrf.mxu0
        %v489 = vadd.f32 0.0, %v488
        %v490 = vpop.f32.mrf.mxu0
        %v491 = vadd.f32 0.0, %v490
        %492 = vmatprep.mubr.f32.mxu0 %v261
        %493 = vmatmul.mubr.f32.gmra.mxu0 %v260
        %v494 = vpop.f32.mrf.mxu0
        %v495 = vadd.f32 0.0, %v494
        %v496 = vpop.f32.mrf.mxu0
        %v497 = vadd.f32 0.0, %v496
        %498 = vmatprep.mubr.f32.mxu0 %v263
        %499 = vmatmul.mubr.f32.gmra.mxu0 %v262
        %v500 = vpop.f32.mrf.mxu0
        %v501 = vadd.f32 0.0, %v500
        %v502 = vpop.f32.mrf.mxu0
        %v503 = vadd.f32 0.0, %v502
        %504 = vmatprep.mubr.f32.mxu0 %v265
        %505 = vmatmul.mubr.f32.gmra.mxu0 %v264
        %v506 = vpop.f32.mrf.mxu0
        %v507 = vadd.f32 0.0, %v506
        %v508 = vpop.f32.mrf.mxu0
        %v509 = vadd.f32 0.0, %v508
        %510 = vmatprep.mubr.f32.mxu0 %v267
        %511 = vmatmul.mubr.f32.gmra.mxu0 %v266
        %v512 = vpop.f32.mrf.mxu0
        %v513 = vadd.f32 0.0, %v512
        %v514 = vpop.f32.mrf.mxu0
        %v515 = vadd.f32 0.0, %v514
        %516 = vmatprep.mubr.f32.mxu0 %v269
        %517 = vmatmul.mubr.f32.gmra.mxu0 %v268
        %v518 = vpop.f32.mrf.mxu0
        %v519 = vadd.f32 0.0, %v518
        %v520 = vpop.f32.mrf.mxu0
        %v521 = vadd.f32 0.0, %v520
        %522 = vmatprep.mubr.f32.mxu0 %v271
        %523 = vmatmul.mubr.f32.gmra.mxu0 %v270
        %v524 = vpop.f32.mrf.mxu0
        %v525 = vadd.f32 0.0, %v524
        %v526 = vpop.f32.mrf.mxu0
        %v527 = vadd.f32 0.0, %v526
        %528 = vmatprep.mubr.f32.mxu0 %v273
        %529 = vmatmul.mubr.f32.gmra.mxu0 %v272
        %v530 = vpop.f32.mrf.mxu0
        %v531 = vadd.f32 0.0, %v530
        %v532 = vpop.f32.mrf.mxu0
        %v533 = vadd.f32 0.0, %v532
        %534 = vmatprep.mubr.f32.mxu0 %v275
        %535 = vmatmul.mubr.f32.gmra.mxu0 %v274
        %v536 = vpop.f32.mrf.mxu0
        %v537 = vadd.f32 0.0, %v536
        %v538 = vpop.f32.mrf.mxu0
        %v539 = vadd.f32 0.0, %v538
        %540 = vmatprep.mubr.f32.mxu0 %v277
        %541 = vmatmul.mubr.f32.gmra.mxu0 %v276
        %v542 = vpop.f32.mrf.mxu0
        %v543 = vadd.f32 0.0, %v542
        %v544 = vpop.f32.mrf.mxu0
        %v545 = vadd.f32 0.0, %v544
        %546 = vmatprep.mubr.f32.mxu0 %v279
        %547 = vmatmul.mubr.f32.gmra.mxu0 %v278
        %v548 = vpop.f32.mrf.mxu0
        %v549 = vadd.f32 0.0, %v548
        %v550 = vpop.f32.mrf.mxu0
        %v551 = vadd.f32 0.0, %v550
        %552 = vmatprep.mubr.f32.mxu0 %v281
        %553 = vmatmul.mubr.f32.gmra.mxu0 %v280
        %v554 = vpop.f32.mrf.mxu0
        %v555 = vadd.f32 0.0, %v554
        %v556 = vpop.f32.mrf.mxu0
        %v557 = vadd.f32 0.0, %v556
        %558 = vmatprep.mubr.f32.mxu0 %v283
        %559 = vmatmul.mubr.f32.gmra.mxu0 %v282
        %v560 = vpop.f32.mrf.mxu0
        %v561 = vadd.f32 0.0, %v560
        %v562 = vpop.f32.mrf.mxu0
        %v563 = vadd.f32 0.0, %v562
        %564 = vmatprep.mubr.f32.mxu0 %v285
        %565 = vmatmul.mubr.f32.gmra.mxu0 %v284
        %v566 = vpop.f32.mrf.mxu0
        %v567 = vadd.f32 0.0, %v566
        %v568 = vpop.f32.mrf.mxu0
        %v569 = vadd.f32 0.0, %v568
        %570 = vmatprep.mubr.f32.mxu0 %v287
        %571 = vmatmul.mubr.f32.gmra.mxu0 %v286
        %v572 = vpop.f32.mrf.mxu0
        %v573 = vadd.f32 0.0, %v572
        %v574 = vpop.f32.mrf.mxu0
        %v575 = vadd.f32 0.0, %v574
        %576 = vmatprep.mubr.f32.mxu0 %v289
        %577 = vmatmul.mubr.f32.gmra.mxu0 %v288
        %v578 = vpop.f32.mrf.mxu0
        %v579 = vadd.f32 0.0, %v578
        %v580 = vpop.f32.mrf.mxu0
        %v581 = vadd.f32 0.0, %v580
        %582 = vmatprep.mubr.f32.mxu0 %v291
        %583 = vmatmul.mubr.f32.gmra.mxu0 %v290
        %v584 = vpop.f32.mrf.mxu0
        %v585 = vadd.f32 0.0, %v584
        %v586 = vpop.f32.mrf.mxu0
        %v587 = vadd.f32 0.0, %v586
        %588 = vmatprep.mubr.f32.mxu0 %v293
        %589 = vmatmul.mubr.f32.gmra.mxu0 %v292
        %v590 = vpop.f32.mrf.mxu0
        %v591 = vadd.f32 0.0, %v590
        %v592 = vpop.f32.mrf.mxu0
        %v593 = vadd.f32 0.0, %v592
        %594 = vmatprep.mubr.f32.mxu0 %v295
        %595 = vmatmul.mubr.f32.gmra.mxu0 %v294
        %v596 = vpop.f32.mrf.mxu0
        %v597 = vadd.f32 0.0, %v596
        %v598 = vpop.f32.mrf.mxu0
        %v599 = vadd.f32 0.0, %v598
        %600 = vmatprep.mubr.f32.mxu0 %v297
        %601 = vmatmul.mubr.f32.gmra.mxu0 %v296
        %v602 = vpop.f32.mrf.mxu0
        %v603 = vadd.f32 0.0, %v602
        %v604 = vpop.f32.mrf.mxu0
        %v605 = vadd.f32 0.0, %v604
        %606 = vmatprep.mubr.f32.mxu0 %v299
        %607 = vmatmul.mubr.f32.gmra.mxu0 %v298
        %v608 = vpop.f32.mrf.mxu0
        %v609 = vadd.f32 0.0, %v608
        %v610 = vpop.f32.mrf.mxu0
        %v611 = vadd.f32 0.0, %v610
        %612 = vmatprep.mubr.f32.mxu0 %v301
        %613 = vmatmul.mubr.f32.gmra.mxu0 %v300
        %v614 = vpop.f32.mrf.mxu0
        %v615 = vadd.f32 0.0, %v614
        %v616 = vpop.f32.mrf.mxu0
        %v617 = vadd.f32 0.0, %v616
        %618 = vmatprep.mubr.f32.mxu0 %v303
        %619 = vmatmul.mubr.f32.gmra.mxu0 %v302
        %v620 = vpop.f32.mrf.mxu0
        %v621 = vadd.f32 0.0, %v620
        %v622 = vpop.f32.mrf.mxu0
        %v623 = vadd.f32 0.0, %v622
        %624 = vdwg.mxu0
        %v625 = vmul.f32 %v240, %v240
        %v626 = vmul.f32 %v241, %v241
        %v627 = vmul.f32 %v242, %v242
        %v628 = vmul.f32 %v243, %v243
        %v629 = vmul.f32 %v244, %v244
        %v630 = vmul.f32 %v245, %v245
        %v631 = vmul.f32 %v246, %v246
        %v632 = vmul.f32 %v247, %v247
        %v633 = vmul.f32 %v248, %v248
        %v634 = vmul.f32 %v249, %v249
        %v635 = vmul.f32 %v250, %v250
        %v636 = vmul.f32 %v251, %v251
        %v637 = vmul.f32 %v252, %v252
        %v638 = vmul.f32 %v253, %v253
        %v639 = vmul.f32 %v254, %v254
        %v640 = vmul.f32 %v255, %v255
        %v641 = vmul.f32 %v256, %v256
        %v642 = vmul.f32 %v257, %v257
        %v643 = vmul.f32 %v258, %v258
        %v644 = vmul.f32 %v259, %v259
        %v645 = vmul.f32 %v260, %v260
        %v646 = vmul.f32 %v261, %v261
        %v647 = vmul.f32 %v262, %v262
        %v648 = vmul.f32 %v263, %v263
        %v649 = vmul.f32 %v264, %v264
        %v650 = vmul.f32 %v265, %v265
        %v651 = vmul.f32 %v266, %v266
        %v652 = vmul.f32 %v267, %v267
        %v653 = vmul.f32 %v268, %v268
        %v654 = vmul.f32 %v269, %v269
        %v655 = vmul.f32 %v270, %v270
        %v656 = vmul.f32 %v271, %v271
        %v657 = vmul.f32 %v272, %v272
        %v658 = vmul.f32 %v273, %v273
        %v659 = vmul.f32 %v274, %v274
        %v660 = vmul.f32 %v275, %v275
        %v661 = vmul.f32 %v276, %v276
        %v662 = vmul.f32 %v277, %v277
        %v663 = vmul.f32 %v278, %v278
        %v664 = vmul.f32 %v279, %v279
        %v665 = vmul.f32 %v280, %v280
        %v666 = vmul.f32 %v281, %v281
        %v667 = vmul.f32 %v282, %v282
        %v668 = vmul.f32 %v283, %v283
        %v669 = vmul.f32 %v284, %v284
        %v670 = vmul.f32 %v285, %v285
        %v671 = vmul.f32 %v286, %v286
        %v672 = vmul.f32 %v287, %v287
        %v673 = vmul.f32 %v288, %v288
        %v674 = vmul.f32 %v289, %v289
        %v675 = vmul.f32 %v290, %v290
        %v676 = vmul.f32 %v291, %v291
        %v677 = vmul.f32 %v292, %v292
        %v678 = vmul.f32 %v293, %v293
        %v679 = vmul.f32 %v294, %v294
        %v680 = vmul.f32 %v295, %v295
        %v681 = vmul.f32 %v296, %v296
        %v682 = vmul.f32 %v297, %v297
        %v683 = vmul.f32 %v298, %v298
        %v684 = vmul.f32 %v299, %v299
        %v685 = vmul.f32 %v300, %v300
        %v686 = vmul.f32 %v301, %v301
        %v687 = vmul.f32 %v302, %v302
        %v688 = vmul.f32 %v303, %v303
        %v689 = vadd.f32 %v625, %v626
        %690 = vadd.xlane.f32.xlu0 %v689
        %v691 = vpop.xlane.xlu0 %690
        %v692 = vadd.f32 %v627, %v628
        %693 = vadd.xlane.f32.xlu0 %v692
        %v694 = vpop.xlane.xlu0 %693
        %v695 = vadd.f32 %v629, %v630
        %696 = vadd.xlane.f32.xlu0 %v695
        %v697 = vpop.xlane.xlu0 %696
        %v698 = vadd.f32 %v631, %v632
        %699 = vadd.xlane.f32.xlu0 %v698
        %v700 = vpop.xlane.xlu0 %699
        %v701 = vadd.f32 %v633, %v634
        %702 = vadd.xlane.f32.xlu0 %v701
        %v703 = vpop.xlane.xlu0 %702
        %v704 = vadd.f32 %v635, %v636
        %705 = vadd.xlane.f32.xlu0 %v704
        %v706 = vpop.xlane.xlu0 %705
        %v707 = vadd.f32 %v637, %v638
        %708 = vadd.xlane.f32.xlu0 %v707
        %v709 = vpop.xlane.xlu0 %708
        %v710 = vadd.f32 %v639, %v640
        %711 = vadd.xlane.f32.xlu0 %v710
        %v712 = vpop.xlane.xlu0 %711
        %v713 = vadd.f32 %v641, %v642
        %714 = vadd.xlane.f32.xlu0 %v713
        %v715 = vpop.xlane.xlu0 %714
        %v716 = vadd.f32 %v643, %v644
        %717 = vadd.xlane.f32.xlu0 %v716
        %v718 = vpop.xlane.xlu0 %717
        %v719 = vadd.f32 %v645, %v646
        %720 = vadd.xlane.f32.xlu0 %v719
        %v721 = vpop.xlane.xlu0 %720
        %v722 = vadd.f32 %v647, %v648
        %723 = vadd.xlane.f32.xlu0 %v722
        %v724 = vpop.xlane.xlu0 %723
        %v725 = vadd.f32 %v649, %v650
        %726 = vadd.xlane.f32.xlu0 %v725
        %v727 = vpop.xlane.xlu0 %726
        %v728 = vadd.f32 %v651, %v652
        %729 = vadd.xlane.f32.xlu0 %v728
        %v730 = vpop.xlane.xlu0 %729
        %v731 = vadd.f32 %v653, %v654
        %732 = vadd.xlane.f32.xlu0 %v731
        %v733 = vpop.xlane.xlu0 %732
        %v734 = vadd.f32 %v655, %v656
        %735 = vadd.xlane.f32.xlu0 %v734
        %v736 = vpop.xlane.xlu0 %735
        %v737 = vadd.f32 %v657, %v658
        %738 = vadd.xlane.f32.xlu0 %v737
        %v739 = vpop.xlane.xlu0 %738
        %v740 = vadd.f32 %v659, %v660
        %741 = vadd.xlane.f32.xlu0 %v740
        %v742 = vpop.xlane.xlu0 %741
        %v743 = vadd.f32 %v661, %v662
        %744 = vadd.xlane.f32.xlu0 %v743
        %v745 = vpop.xlane.xlu0 %744
        %v746 = vadd.f32 %v663, %v664
        %747 = vadd.xlane.f32.xlu0 %v746
        %v748 = vpop.xlane.xlu0 %747
        %v749 = vadd.f32 %v665, %v666
        %750 = vadd.xlane.f32.xlu0 %v749
        %v751 = vpop.xlane.xlu0 %750
        %v752 = vadd.f32 %v667, %v668
        %753 = vadd.xlane.f32.xlu0 %v752
        %v754 = vpop.xlane.xlu0 %753
        %v755 = vadd.f32 %v669, %v670
        %756 = vadd.xlane.f32.xlu0 %v755
        %v757 = vpop.xlane.xlu0 %756
        %v758 = vadd.f32 %v671, %v672
        %759 = vadd.xlane.f32.xlu0 %v758
        %v760 = vpop.xlane.xlu0 %759
        %v761 = vadd.f32 %v673, %v674
        %762 = vadd.xlane.f32.xlu0 %v761
        %v763 = vpop.xlane.xlu0 %762
        %v764 = vadd.f32 %v675, %v676
        %765 = vadd.xlane.f32.xlu0 %v764
        %v766 = vpop.xlane.xlu0 %765
        %v767 = vadd.f32 %v677, %v678
        %768 = vadd.xlane.f32.xlu0 %v767
        %v769 = vpop.xlane.xlu0 %768
        %v770 = vadd.f32 %v679, %v680
        %771 = vadd.xlane.f32.xlu0 %v770
        %v772 = vpop.xlane.xlu0 %771
        %v773 = vadd.f32 %v681, %v682
        %774 = vadd.xlane.f32.xlu0 %v773
        %v775 = vpop.xlane.xlu0 %774
        %v776 = vadd.f32 %v683, %v684
        %777 = vadd.xlane.f32.xlu0 %v776
        %v778 = vpop.xlane.xlu0 %777
        %v779 = vadd.f32 %v685, %v686
        %780 = vadd.xlane.f32.xlu0 %v779
        %v781 = vpop.xlane.xlu0 %780
        %v782 = vadd.f32 %v687, %v688
        %783 = vadd.xlane.f32.xlu0 %v782
        %v784 = vpop.xlane.xlu0 %783
        %v785 = vmul.f32 %v304, %v304
        %v786 = vmul.f32 %v305, %v305
        %v787 = vmul.f32 %v306, %v306
        %v788 = vmul.f32 %v307, %v307
        %v789 = vmul.f32 %v308, %v308
        %v790 = vmul.f32 %v309, %v309
        %v791 = vmul.f32 %v310, %v310
        %v792 = vmul.f32 %v311, %v311
        %v793 = vmul.f32 %v312, %v312
        %v794 = vmul.f32 %v313, %v313
        %v795 = vmul.f32 %v314, %v314
        %v796 = vmul.f32 %v315, %v315
        %v797 = vmul.f32 %v316, %v316
        %v798 = vmul.f32 %v317, %v317
        %v799 = vmul.f32 %v318, %v318
        %v800 = vmul.f32 %v319, %v319
        %v801 = vmul.f32 %v320, %v320
        %v802 = vmul.f32 %v321, %v321
        %v803 = vmul.f32 %v322, %v322
        %v804 = vmul.f32 %v323, %v323
        %v805 = vmul.f32 %v324, %v324
        %v806 = vmul.f32 %v325, %v325
        %v807 = vmul.f32 %v326, %v326
        %v808 = vmul.f32 %v327, %v327
        %v809 = vmul.f32 %v328, %v328
        %v810 = vmul.f32 %v329, %v329
        %v811 = vmul.f32 %v330, %v330
        %v812 = vmul.f32 %v331, %v331
        %v813 = vmul.f32 %v332, %v332
        %v814 = vmul.f32 %v333, %v333
        %v815 = vmul.f32 %v334, %v334
        %v816 = vmul.f32 %v335, %v335
        %v817 = vmul.f32 %v336, %v336
        %v818 = vmul.f32 %v337, %v337
        %v819 = vmul.f32 %v338, %v338
        %v820 = vmul.f32 %v339, %v339
        %v821 = vmul.f32 %v340, %v340
        %v822 = vmul.f32 %v341, %v341
        %v823 = vmul.f32 %v342, %v342
        %v824 = vmul.f32 %v343, %v343
        %v825 = vmul.f32 %v344, %v344
        %v826 = vmul.f32 %v345, %v345
        %v827 = vmul.f32 %v346, %v346
        %v828 = vmul.f32 %v347, %v347
        %v829 = vmul.f32 %v348, %v348
        %v830 = vmul.f32 %v349, %v349
        %v831 = vmul.f32 %v350, %v350
        %v832 = vmul.f32 %v351, %v351
        %v833 = vmul.f32 %v352, %v352
        %v834 = vmul.f32 %v353, %v353
        %v835 = vmul.f32 %v354, %v354
        %v836 = vmul.f32 %v355, %v355
        %v837 = vmul.f32 %v356, %v356
        %v838 = vmul.f32 %v357, %v357
        %v839 = vmul.f32 %v358, %v358
        %v840 = vmul.f32 %v359, %v359
        %v841 = vmul.f32 %v360, %v360
        %v842 = vmul.f32 %v361, %v361
        %v843 = vmul.f32 %v362, %v362
        %v844 = vmul.f32 %v363, %v363
        %v845 = vmul.f32 %v364, %v364
        %v846 = vmul.f32 %v365, %v365
        %v847 = vmul.f32 %v366, %v366
        %v848 = vmul.f32 %v367, %v367
        %v849 = vadd.f32 %v785, %v786
        %850 = vadd.xlane.f32.xlu0 %v849
        %v851 = vpop.xlane.xlu0 %850
        %v852 = vadd.f32 %v787, %v788
        %853 = vadd.xlane.f32.xlu0 %v852
        %v854 = vpop.xlane.xlu0 %853
        %v855 = vadd.f32 %v789, %v790
        %856 = vadd.xlane.f32.xlu0 %v855
        %v857 = vpop.xlane.xlu0 %856
        %v858 = vadd.f32 %v791, %v792
        %859 = vadd.xlane.f32.xlu0 %v858
        %v860 = vpop.xlane.xlu0 %859
        %v861 = vadd.f32 %v793, %v794
        %862 = vadd.xlane.f32.xlu0 %v861
        %v863 = vpop.xlane.xlu0 %862
        %v864 = vadd.f32 %v795, %v796
        %865 = vadd.xlane.f32.xlu0 %v864
        %v866 = vpop.xlane.xlu0 %865
        %v867 = vadd.f32 %v797, %v798
        %868 = vadd.xlane.f32.xlu0 %v867
        %v869 = vpop.xlane.xlu0 %868
        %v870 = vadd.f32 %v799, %v800
        %871 = vadd.xlane.f32.xlu0 %v870
        %v872 = vpop.xlane.xlu0 %871
        %v873 = vadd.f32 %v801, %v802
        %874 = vadd.xlane.f32.xlu0 %v873
        %v875 = vpop.xlane.xlu0 %874
        %v876 = vadd.f32 %v803, %v804
        %877 = vadd.xlane.f32.xlu0 %v876
        %v878 = vpop.xlane.xlu0 %877
        %v879 = vadd.f32 %v805, %v806
        %880 = vadd.xlane.f32.xlu0 %v879
        %v881 = vpop.xlane.xlu0 %880
        %v882 = vadd.f32 %v807, %v808
        %883 = vadd.xlane.f32.xlu0 %v882
        %v884 = vpop.xlane.xlu0 %883
        %v885 = vadd.f32 %v809, %v810
        %886 = vadd.xlane.f32.xlu0 %v885
        %v887 = vpop.xlane.xlu0 %886
        %v888 = vadd.f32 %v811, %v812
        %889 = vadd.xlane.f32.xlu0 %v888
        %v890 = vpop.xlane.xlu0 %889
        %v891 = vadd.f32 %v813, %v814
        %892 = vadd.xlane.f32.xlu0 %v891
        %v893 = vpop.xlane.xlu0 %892
        %v894 = vadd.f32 %v815, %v816
        %895 = vadd.xlane.f32.xlu0 %v894
        %v896 = vpop.xlane.xlu0 %895
        %v897 = vadd.f32 %v817, %v818
        %898 = vadd.xlane.f32.xlu0 %v897
        %v899 = vpop.xlane.xlu0 %898
        %v900 = vadd.f32 %v819, %v820
        %901 = vadd.xlane.f32.xlu0 %v900
        %v902 = vpop.xlane.xlu0 %901
        %v903 = vadd.f32 %v821, %v822
        %904 = vadd.xlane.f32.xlu0 %v903
        %v905 = vpop.xlane.xlu0 %904
        %v906 = vadd.f32 %v823, %v824
        %907 = vadd.xlane.f32.xlu0 %v906
        %v908 = vpop.xlane.xlu0 %907
        %v909 = vadd.f32 %v825, %v826
        %910 = vadd.xlane.f32.xlu0 %v909
        %v911 = vpop.xlane.xlu0 %910
        %v912 = vadd.f32 %v827, %v828
        %913 = vadd.xlane.f32.xlu0 %v912
        %v914 = vpop.xlane.xlu0 %913
        %v915 = vadd.f32 %v829, %v830
        %916 = vadd.xlane.f32.xlu0 %v915
        %v917 = vpop.xlane.xlu0 %916
        %v918 = vadd.f32 %v831, %v832
        %919 = vadd.xlane.f32.xlu0 %v918
        %v920 = vpop.xlane.xlu0 %919
        %v921 = vadd.f32 %v833, %v834
        %922 = vadd.xlane.f32.xlu0 %v921
        %v923 = vpop.xlane.xlu0 %922
        %v924 = vadd.f32 %v835, %v836
        %925 = vadd.xlane.f32.xlu0 %v924
        %v926 = vpop.xlane.xlu0 %925
        %v927 = vadd.f32 %v837, %v838
        %928 = vadd.xlane.f32.xlu0 %v927
        %v929 = vpop.xlane.xlu0 %928
        %v930 = vadd.f32 %v839, %v840
        %931 = vadd.xlane.f32.xlu0 %v930
        %v932 = vpop.xlane.xlu0 %931
        %v933 = vadd.f32 %v841, %v842
        %934 = vadd.xlane.f32.xlu0 %v933
        %v935 = vpop.xlane.xlu0 %934
        %v936 = vadd.f32 %v843, %v844
        %937 = vadd.xlane.f32.xlu0 %v936
        %v938 = vpop.xlane.xlu0 %937
        %v939 = vadd.f32 %v845, %v846
        %940 = vadd.xlane.f32.xlu0 %v939
        %v941 = vpop.xlane.xlu0 %940
        %v942 = vadd.f32 %v847, %v848
        %943 = vadd.xlane.f32.xlu0 %v942
        %v944 = vpop.xlane.xlu0 %943
        %945 = vxpose.xlu0.b32.start [1/16] %v851, 128
        %946 = vxpose.xlu0.b32.cont [2/16] %v854, 128
        %947 = vxpose.xlu0.b32.cont [3/16] %v857, 128
        %948 = vxpose.xlu0.b32.cont [4/16] %v860, 128
        %949 = vxpose.xlu0.b32.cont [5/16] %v863, 128
        %950 = vxpose.xlu0.b32.cont [6/16] %v866, 128
        %951 = vxpose.xlu0.b32.cont [7/16] %v869, 128
        %952 = vxpose.xlu0.b32.cont [8/16] %v872, 128
        %953 = vxpose.xlu0.b32.cont [9/16] %v875, 128
        %954 = vxpose.xlu0.b32.cont [10/16] %v878, 128
        %955 = vxpose.xlu0.b32.cont [11/16] %v881, 128
        %956 = vxpose.xlu0.b32.cont [12/16] %v884, 128
        %957 = vxpose.xlu0.b32.cont [13/16] %v887, 128
        %958 = vxpose.xlu0.b32.cont [14/16] %v890, 128
        %959 = vxpose.xlu0.b32.cont [15/16] %v893, 128
        %960 = vxpose.xlu0.b32.end [16/16] %v896, 128
        %v961 = vpop.trf.xlu0
        %v962 = vpop.trf.xlu0
        %v963 = vpop.trf.xlu0
        %v964 = vpop.trf.xlu0
        %v965 = vpop.trf.xlu0
        %v966 = vpop.trf.xlu0
        %v967 = vpop.trf.xlu0
        %v968 = vpop.trf.xlu0
        %v969 = vpop.trf.xlu0
        %v970 = vpop.trf.xlu0
        %v971 = vpop.trf.xlu0
        %v972 = vpop.trf.xlu0
        %v973 = vpop.trf.xlu0
        %v974 = vpop.trf.xlu0
        %v975 = vpop.trf.xlu0
        %v976 = vpop.trf.xlu0
        %977 = vxpose.xlu0.b32.start [1/16] %v899, 128
        %978 = vxpose.xlu0.b32.cont [2/16] %v902, 128
        %979 = vxpose.xlu0.b32.cont [3/16] %v905, 128
        %980 = vxpose.xlu0.b32.cont [4/16] %v908, 128
        %981 = vxpose.xlu0.b32.cont [5/16] %v911, 128
        %982 = vxpose.xlu0.b32.cont [6/16] %v914, 128
        %983 = vxpose.xlu0.b32.cont [7/16] %v917, 128
        %984 = vxpose.xlu0.b32.cont [8/16] %v920, 128
        %985 = vxpose.xlu0.b32.cont [9/16] %v923, 128
        %986 = vxpose.xlu0.b32.cont [10/16] %v926, 128
        %987 = vxpose.xlu0.b32.cont [11/16] %v929, 128
        %988 = vxpose.xlu0.b32.cont [12/16] %v932, 128
        %989 = vxpose.xlu0.b32.cont [13/16] %v935, 128
        %990 = vxpose.xlu0.b32.cont [14/16] %v938, 128
        %991 = vxpose.xlu0.b32.cont [15/16] %v941, 128
        %992 = vxpose.xlu0.b32.end [16/16] %v944, 128
        %v993 = vpop.trf.xlu0
        %v994 = vpop.trf.xlu0
        %v995 = vpop.trf.xlu0
        %v996 = vpop.trf.xlu0
        %v997 = vpop.trf.xlu0
        %v998 = vpop.trf.xlu0
        %v999 = vpop.trf.xlu0
        %v1000 = vpop.trf.xlu0
        %v1001 = vpop.trf.xlu0
        %v1002 = vpop.trf.xlu0
        %v1003 = vpop.trf.xlu0
        %v1004 = vpop.trf.xlu0
        %v1005 = vpop.trf.xlu0
        %v1006 = vpop.trf.xlu0
        %v1007 = vpop.trf.xlu0
        %v1008 = vpop.trf.xlu0
        %v1009 = vlaneseq
        %v1010 = vshrl.u32 %v1009, 7
        %v1011 = vsub.s32 0, %v1010
        %v1012 = vrot.slane %v961, %v1011
        %v1013 = vlaneseq
        %v1014 = vshrl.u32 %v1013, 7
        %v1015 = vsub.s32 0, %v1014
        %v1016 = vrot.slane %v993, %v1015
        %v1017 = vadd.f32 %v691, %v1012
        %v1018 = vadd.f32 %v691, %v1016
        %v1019 = vadd.f32 %v694, %v1012
        %v1020 = vadd.f32 %v694, %v1016
        %v1021 = vadd.f32 %v697, %v1012
        %v1022 = vadd.f32 %v697, %v1016
        %v1023 = vadd.f32 %v700, %v1012
        %v1024 = vadd.f32 %v700, %v1016
        %v1025 = vadd.f32 %v703, %v1012
        %v1026 = vadd.f32 %v703, %v1016
        %v1027 = vadd.f32 %v706, %v1012
        %v1028 = vadd.f32 %v706, %v1016
        %v1029 = vadd.f32 %v709, %v1012
        %v1030 = vadd.f32 %v709, %v1016
        %v1031 = vadd.f32 %v712, %v1012
        %v1032 = vadd.f32 %v712, %v1016
        %v1033 = vadd.f32 %v715, %v1012
        %v1034 = vadd.f32 %v715, %v1016
        %v1035 = vadd.f32 %v718, %v1012
        %v1036 = vadd.f32 %v718, %v1016
        %v1037 = vadd.f32 %v721, %v1012
        %v1038 = vadd.f32 %v721, %v1016
        %v1039 = vadd.f32 %v724, %v1012
        %v1040 = vadd.f32 %v724, %v1016
        %v1041 = vadd.f32 %v727, %v1012
        %v1042 = vadd.f32 %v727, %v1016
        %v1043 = vadd.f32 %v730, %v1012
        %v1044 = vadd.f32 %v730, %v1016
        %v1045 = vadd.f32 %v733, %v1012
        %v1046 = vadd.f32 %v733, %v1016
        %v1047 = vadd.f32 %v736, %v1012
        %v1048 = vadd.f32 %v736, %v1016
        %v1049 = vadd.f32 %v739, %v1012
        %v1050 = vadd.f32 %v739, %v1016
        %v1051 = vadd.f32 %v742, %v1012
        %v1052 = vadd.f32 %v742, %v1016
        %v1053 = vadd.f32 %v745, %v1012
        %v1054 = vadd.f32 %v745, %v1016
        %v1055 = vadd.f32 %v748, %v1012
        %v1056 = vadd.f32 %v748, %v1016
        %v1057 = vadd.f32 %v751, %v1012
        %v1058 = vadd.f32 %v751, %v1016
        %v1059 = vadd.f32 %v754, %v1012
        %v1060 = vadd.f32 %v754, %v1016
        %v1061 = vadd.f32 %v757, %v1012
        %v1062 = vadd.f32 %v757, %v1016
        %v1063 = vadd.f32 %v760, %v1012
        %v1064 = vadd.f32 %v760, %v1016
        %v1065 = vadd.f32 %v763, %v1012
        %v1066 = vadd.f32 %v763, %v1016
        %v1067 = vadd.f32 %v766, %v1012
        %v1068 = vadd.f32 %v766, %v1016
        %v1069 = vadd.f32 %v769, %v1012
        %v1070 = vadd.f32 %v769, %v1016
        %v1071 = vadd.f32 %v772, %v1012
        %v1072 = vadd.f32 %v772, %v1016
        %v1073 = vadd.f32 %v775, %v1012
        %v1074 = vadd.f32 %v775, %v1016
        %v1075 = vadd.f32 %v778, %v1012
        %v1076 = vadd.f32 %v778, %v1016
        %v1077 = vadd.f32 %v781, %v1012
        %v1078 = vadd.f32 %v781, %v1016
        %v1079 = vadd.f32 %v784, %v1012
        %v1080 = vadd.f32 %v784, %v1016
        %v1081 = vmul.f32 %v435, 2.0
        %v1082 = vmul.f32 %v437, 2.0
        %v1083 = vmul.f32 %v441, 2.0
        %v1084 = vmul.f32 %v443, 2.0
        %v1085 = vmul.f32 %v447, 2.0
        %v1086 = vmul.f32 %v449, 2.0
        %v1087 = vmul.f32 %v453, 2.0
        %v1088 = vmul.f32 %v455, 2.0
        %v1089 = vmul.f32 %v459, 2.0
        %v1090 = vmul.f32 %v461, 2.0
        %v1091 = vmul.f32 %v465, 2.0
        %v1092 = vmul.f32 %v467, 2.0
        %v1093 = vmul.f32 %v471, 2.0
        %v1094 = vmul.f32 %v473, 2.0
        %v1095 = vmul.f32 %v477, 2.0
        %v1096 = vmul.f32 %v479, 2.0
        %v1097 = vmul.f32 %v483, 2.0
        %v1098 = vmul.f32 %v485, 2.0
        %v1099 = vmul.f32 %v489, 2.0
        %v1100 = vmul.f32 %v491, 2.0
        %v1101 = vmul.f32 %v495, 2.0
        %v1102 = vmul.f32 %v497, 2.0
        %v1103 = vmul.f32 %v501, 2.0
        %v1104 = vmul.f32 %v503, 2.0
        %v1105 = vmul.f32 %v507, 2.0
        %v1106 = vmul.f32 %v509, 2.0
        %v1107 = vmul.f32 %v513, 2.0
        %v1108 = vmul.f32 %v515, 2.0
        %v1109 = vmul.f32 %v519, 2.0
        %v1110 = vmul.f32 %v521, 2.0
        %v1111 = vmul.f32 %v525, 2.0
        %v1112 = vmul.f32 %v527, 2.0
        %v1113 = vmul.f32 %v531, 2.0
        %v1114 = vmul.f32 %v533, 2.0
        %v1115 = vmul.f32 %v537, 2.0
        %v1116 = vmul.f32 %v539, 2.0
        %v1117 = vmul.f32 %v543, 2.0
        %v1118 = vmul.f32 %v545, 2.0
        %v1119 = vmul.f32 %v549, 2.0
        %v1120 = vmul.f32 %v551, 2.0
        %v1121 = vmul.f32 %v555, 2.0
        %v1122 = vmul.f32 %v557, 2.0
        %v1123 = vmul.f32 %v561, 2.0
        %v1124 = vmul.f32 %v563, 2.0
        %v1125 = vmul.f32 %v567, 2.0
        %v1126 = vmul.f32 %v569, 2.0
        %v1127 = vmul.f32 %v573, 2.0
        %v1128 = vmul.f32 %v575, 2.0
        %v1129 = vmul.f32 %v579, 2.0
        %v1130 = vmul.f32 %v581, 2.0
        %v1131 = vmul.f32 %v585, 2.0
        %v1132 = vmul.f32 %v587, 2.0
        %v1133 = vmul.f32 %v591, 2.0
        %v1134 = vmul.f32 %v593, 2.0
        %v1135 = vmul.f32 %v597, 2.0
        %v1136 = vmul.f32 %v599, 2.0
        %v1137 = vmul.f32 %v603, 2.0
        %v1138 = vmul.f32 %v605, 2.0
        %v1139 = vmul.f32 %v609, 2.0
        %v1140 = vmul.f32 %v611, 2.0
        %v1141 = vmul.f32 %v615, 2.0
        %v1142 = vmul.f32 %v617, 2.0
        %v1143 = vmul.f32 %v621, 2.0
        %v1144 = vmul.f32 %v623, 2.0
        %v1145 = vsub.f32 %v1017, %v1081
        %v1146 = vsub.f32 %v1018, %v1082
        %v1147 = vsub.f32 %v1019, %v1083
        %v1148 = vsub.f32 %v1020, %v1084
        %v1149 = vsub.f32 %v1021, %v1085
        %v1150 = vsub.f32 %v1022, %v1086
        %v1151 = vsub.f32 %v1023, %v1087
        %v1152 = vsub.f32 %v1024, %v1088
        %v1153 = vsub.f32 %v1025, %v1089
        %v1154 = vsub.f32 %v1026, %v1090
        %v1155 = vsub.f32 %v1027, %v1091
        %v1156 = vsub.f32 %v1028, %v1092
        %v1157 = vsub.f32 %v1029, %v1093
        %v1158 = vsub.f32 %v1030, %v1094
        %v1159 = vsub.f32 %v1031, %v1095
        %v1160 = vsub.f32 %v1032, %v1096
        %v1161 = vsub.f32 %v1033, %v1097
        %v1162 = vsub.f32 %v1034, %v1098
        %v1163 = vsub.f32 %v1035, %v1099
        %v1164 = vsub.f32 %v1036, %v1100
        %v1165 = vsub.f32 %v1037, %v1101
        %v1166 = vsub.f32 %v1038, %v1102
        %v1167 = vsub.f32 %v1039, %v1103
        %v1168 = vsub.f32 %v1040, %v1104
        %v1169 = vsub.f32 %v1041, %v1105
        %v1170 = vsub.f32 %v1042, %v1106
        %v1171 = vsub.f32 %v1043, %v1107
        %v1172 = vsub.f32 %v1044, %v1108
        %v1173 = vsub.f32 %v1045, %v1109
        %v1174 = vsub.f32 %v1046, %v1110
        %v1175 = vsub.f32 %v1047, %v1111
        %v1176 = vsub.f32 %v1048, %v1112
        %v1177 = vsub.f32 %v1049, %v1113
        %v1178 = vsub.f32 %v1050, %v1114
        %v1179 = vsub.f32 %v1051, %v1115
        %v1180 = vsub.f32 %v1052, %v1116
        %v1181 = vsub.f32 %v1053, %v1117
        %v1182 = vsub.f32 %v1054, %v1118
        %v1183 = vsub.f32 %v1055, %v1119
        %v1184 = vsub.f32 %v1056, %v1120
        %v1185 = vsub.f32 %v1057, %v1121
        %v1186 = vsub.f32 %v1058, %v1122
        %v1187 = vsub.f32 %v1059, %v1123
        %v1188 = vsub.f32 %v1060, %v1124
        %v1189 = vsub.f32 %v1061, %v1125
        %v1190 = vsub.f32 %v1062, %v1126
        %v1191 = vsub.f32 %v1063, %v1127
        %v1192 = vsub.f32 %v1064, %v1128
        %v1193 = vsub.f32 %v1065, %v1129
        %v1194 = vsub.f32 %v1066, %v1130
        %v1195 = vsub.f32 %v1067, %v1131
        %v1196 = vsub.f32 %v1068, %v1132
        %v1197 = vsub.f32 %v1069, %v1133
        %v1198 = vsub.f32 %v1070, %v1134
        %v1199 = vsub.f32 %v1071, %v1135
        %v1200 = vsub.f32 %v1072, %v1136
        %v1201 = vsub.f32 %v1073, %v1137
        %v1202 = vsub.f32 %v1074, %v1138
        %v1203 = vsub.f32 %v1075, %v1139
        %v1204 = vsub.f32 %v1076, %v1140
        %v1205 = vsub.f32 %v1077, %v1141
        %v1206 = vsub.f32 %v1078, %v1142
        %v1207 = vsub.f32 %v1079, %v1143
        %v1208 = vsub.f32 %v1080, %v1144
        %v1209 = vmax.f32 %v1145, 0.0
        %v1210 = vmax.f32 %v1146, 0.0
        %v1211 = vmax.f32 %v1147, 0.0
        %v1212 = vmax.f32 %v1148, 0.0
        %v1213 = vmax.f32 %v1149, 0.0
        %v1214 = vmax.f32 %v1150, 0.0
        %v1215 = vmax.f32 %v1151, 0.0
        %v1216 = vmax.f32 %v1152, 0.0
        %v1217 = vmax.f32 %v1153, 0.0
        %v1218 = vmax.f32 %v1154, 0.0
        %v1219 = vmax.f32 %v1155, 0.0
        %v1220 = vmax.f32 %v1156, 0.0
        %v1221 = vmax.f32 %v1157, 0.0
        %v1222 = vmax.f32 %v1158, 0.0
        %v1223 = vmax.f32 %v1159, 0.0
        %v1224 = vmax.f32 %v1160, 0.0
        %v1225 = vmax.f32 %v1161, 0.0
        %v1226 = vmax.f32 %v1162, 0.0
        %v1227 = vmax.f32 %v1163, 0.0
        %v1228 = vmax.f32 %v1164, 0.0
        %v1229 = vmax.f32 %v1165, 0.0
        %v1230 = vmax.f32 %v1166, 0.0
        %v1231 = vmax.f32 %v1167, 0.0
        %v1232 = vmax.f32 %v1168, 0.0
        %v1233 = vmax.f32 %v1169, 0.0
        %v1234 = vmax.f32 %v1170, 0.0
        %v1235 = vmax.f32 %v1171, 0.0
        %v1236 = vmax.f32 %v1172, 0.0
        %v1237 = vmax.f32 %v1173, 0.0
        %v1238 = vmax.f32 %v1174, 0.0
        %v1239 = vmax.f32 %v1175, 0.0
        %v1240 = vmax.f32 %v1176, 0.0
        %v1241 = vmax.f32 %v1177, 0.0
        %v1242 = vmax.f32 %v1178, 0.0
        %v1243 = vmax.f32 %v1179, 0.0
        %v1244 = vmax.f32 %v1180, 0.0
        %v1245 = vmax.f32 %v1181, 0.0
        %v1246 = vmax.f32 %v1182, 0.0
        %v1247 = vmax.f32 %v1183, 0.0
        %v1248 = vmax.f32 %v1184, 0.0
        %v1249 = vmax.f32 %v1185, 0.0
        %v1250 = vmax.f32 %v1186, 0.0
        %v1251 = vmax.f32 %v1187, 0.0
        %v1252 = vmax.f32 %v1188, 0.0
        %v1253 = vmax.f32 %v1189, 0.0
        %v1254 = vmax.f32 %v1190, 0.0
        %v1255 = vmax.f32 %v1191, 0.0
        %v1256 = vmax.f32 %v1192, 0.0
        %v1257 = vmax.f32 %v1193, 0.0
        %v1258 = vmax.f32 %v1194, 0.0
        %v1259 = vmax.f32 %v1195, 0.0
        %v1260 = vmax.f32 %v1196, 0.0
        %v1261 = vmax.f32 %v1197, 0.0
        %v1262 = vmax.f32 %v1198, 0.0
        %v1263 = vmax.f32 %v1199, 0.0
        %v1264 = vmax.f32 %v1200, 0.0
        %v1265 = vmax.f32 %v1201, 0.0
        %v1266 = vmax.f32 %v1202, 0.0
        %v1267 = vmax.f32 %v1203, 0.0
        %v1268 = vmax.f32 %v1204, 0.0
        %v1269 = vmax.f32 %v1205, 0.0
        %v1270 = vmax.f32 %v1206, 0.0
        %v1271 = vmax.f32 %v1207, 0.0
        %v1272 = vmax.f32 %v1208, 0.0
        %v1273 = vmul.f32 %v1209, -10.0
        %v1274 = vmul.f32 %v1210, -10.0
        %v1275 = vmul.f32 %v1211, -10.0
        %v1276 = vmul.f32 %v1212, -10.0
        %v1277 = vmul.f32 %v1213, -10.0
        %v1278 = vmul.f32 %v1214, -10.0
        %v1279 = vmul.f32 %v1215, -10.0
        %v1280 = vmul.f32 %v1216, -10.0
        %v1281 = vmul.f32 %v1217, -10.0
        %v1282 = vmul.f32 %v1218, -10.0
        %v1283 = vmul.f32 %v1219, -10.0
        %v1284 = vmul.f32 %v1220, -10.0
        %v1285 = vmul.f32 %v1221, -10.0
        %v1286 = vmul.f32 %v1222, -10.0
        %v1287 = vmul.f32 %v1223, -10.0
        %v1288 = vmul.f32 %v1224, -10.0
        %v1289 = vmul.f32 %v1225, -10.0
        %v1290 = vmul.f32 %v1226, -10.0
        %v1291 = vmul.f32 %v1227, -10.0
        %v1292 = vmul.f32 %v1228, -10.0
        %v1293 = vmul.f32 %v1229, -10.0
        %v1294 = vmul.f32 %v1230, -10.0
        %v1295 = vmul.f32 %v1231, -10.0
        %v1296 = vmul.f32 %v1232, -10.0
        %v1297 = vmul.f32 %v1233, -10.0
        %v1298 = vmul.f32 %v1234, -10.0
        %v1299 = vmul.f32 %v1235, -10.0
        %v1300 = vmul.f32 %v1236, -10.0
        %v1301 = vmul.f32 %v1237, -10.0
        %v1302 = vmul.f32 %v1238, -10.0
        %v1303 = vmul.f32 %v1239, -10.0
        %v1304 = vmul.f32 %v1240, -10.0
        %v1305 = vmul.f32 %v1241, -10.0
        %v1306 = vmul.f32 %v1242, -10.0
        %v1307 = vmul.f32 %v1243, -10.0
        %v1308 = vmul.f32 %v1244, -10.0
        %v1309 = vmul.f32 %v1245, -10.0
        %v1310 = vmul.f32 %v1246, -10.0
        %v1311 = vmul.f32 %v1247, -10.0
        %v1312 = vmul.f32 %v1248, -10.0
        %v1313 = vmul.f32 %v1249, -10.0
        %v1314 = vmul.f32 %v1250, -10.0
        %v1315 = vmul.f32 %v1251, -10.0
        %v1316 = vmul.f32 %v1252, -10.0
        %v1317 = vmul.f32 %v1253, -10.0
        %v1318 = vmul.f32 %v1254, -10.0
        %v1319 = vmul.f32 %v1255, -10.0
        %v1320 = vmul.f32 %v1256, -10.0
        %v1321 = vmul.f32 %v1257, -10.0
        %v1322 = vmul.f32 %v1258, -10.0
        %v1323 = vmul.f32 %v1259, -10.0
        %v1324 = vmul.f32 %v1260, -10.0
        %v1325 = vmul.f32 %v1261, -10.0
        %v1326 = vmul.f32 %v1262, -10.0
        %v1327 = vmul.f32 %v1263, -10.0
        %v1328 = vmul.f32 %v1264, -10.0
        %v1329 = vmul.f32 %v1265, -10.0
        %v1330 = vmul.f32 %v1266, -10.0
        %v1331 = vmul.f32 %v1267, -10.0
        %v1332 = vmul.f32 %v1268, -10.0
        %v1333 = vmul.f32 %v1269, -10.0
        %v1334 = vmul.f32 %v1270, -10.0
        %v1335 = vmul.f32 %v1271, -10.0
        %v1336 = vmul.f32 %v1272, -10.0
        %v1337 = vmul.f32 %v1273, 1.442695
        %v1338 = vpow.pop %v1337
        %v1339 = vmul.f32 %v1274, 1.442695
        %v1340 = vpow.pop %v1339
        %v1341 = vmul.f32 %v1275, 1.442695
        %v1342 = vpow.pop %v1341
        %v1343 = vmul.f32 %v1276, 1.442695
        %v1344 = vpow.pop %v1343
        %v1345 = vmul.f32 %v1277, 1.442695
        %v1346 = vpow.pop %v1345
        %v1347 = vmul.f32 %v1278, 1.442695
        %v1348 = vpow.pop %v1347
        %v1349 = vmul.f32 %v1279, 1.442695
        %v1350 = vpow.pop %v1349
        %v1351 = vmul.f32 %v1280, 1.442695
        %v1352 = vpow.pop %v1351
        %v1353 = vmul.f32 %v1281, 1.442695
        %v1354 = vpow.pop %v1353
        %v1355 = vmul.f32 %v1282, 1.442695
        %v1356 = vpow.pop %v1355
        %v1357 = vmul.f32 %v1283, 1.442695
        %v1358 = vpow.pop %v1357
        %v1359 = vmul.f32 %v1284, 1.442695
        %v1360 = vpow.pop %v1359
        %v1361 = vmul.f32 %v1285, 1.442695
        %v1362 = vpow.pop %v1361
        %v1363 = vmul.f32 %v1286, 1.442695
        %v1364 = vpow.pop %v1363
        %v1365 = vmul.f32 %v1287, 1.442695
        %v1366 = vpow.pop %v1365
        %v1367 = vmul.f32 %v1288, 1.442695
        %v1368 = vpow.pop %v1367
        %v1369 = vmul.f32 %v1289, 1.442695
        %v1370 = vpow.pop %v1369
        %v1371 = vmul.f32 %v1290, 1.442695
        %v1372 = vpow.pop %v1371
        %v1373 = vmul.f32 %v1291, 1.442695
        %v1374 = vpow.pop %v1373
        %v1375 = vmul.f32 %v1292, 1.442695
        %v1376 = vpow.pop %v1375
        %v1377 = vmul.f32 %v1293, 1.442695
        %v1378 = vpow.pop %v1377
        %v1379 = vmul.f32 %v1294, 1.442695
        %v1380 = vpow.pop %v1379
        %v1381 = vmul.f32 %v1295, 1.442695
        %v1382 = vpow.pop %v1381
        %v1383 = vmul.f32 %v1296, 1.442695
        %v1384 = vpow.pop %v1383
        %v1385 = vmul.f32 %v1297, 1.442695
        %v1386 = vpow.pop %v1385
        %v1387 = vmul.f32 %v1298, 1.442695
        %v1388 = vpow.pop %v1387
        %v1389 = vmul.f32 %v1299, 1.442695
        %v1390 = vpow.pop %v1389
        %v1391 = vmul.f32 %v1300, 1.442695
        %v1392 = vpow.pop %v1391
        %v1393 = vmul.f32 %v1301, 1.442695
        %v1394 = vpow.pop %v1393
        %v1395 = vmul.f32 %v1302, 1.442695
        %v1396 = vpow.pop %v1395
        %v1397 = vmul.f32 %v1303, 1.442695
        %v1398 = vpow.pop %v1397
        %v1399 = vmul.f32 %v1304, 1.442695
        %v1400 = vpow.pop %v1399
        %v1401 = vmul.f32 %v1305, 1.442695
        %v1402 = vpow.pop %v1401
        %v1403 = vmul.f32 %v1306, 1.442695
        %v1404 = vpow.pop %v1403
        %v1405 = vmul.f32 %v1307, 1.442695
        %v1406 = vpow.pop %v1405
        %v1407 = vmul.f32 %v1308, 1.442695
        %v1408 = vpow.pop %v1407
        %v1409 = vmul.f32 %v1309, 1.442695
        %v1410 = vpow.pop %v1409
        %v1411 = vmul.f32 %v1310, 1.442695
        %v1412 = vpow.pop %v1411
        %v1413 = vmul.f32 %v1311, 1.442695
        %v1414 = vpow.pop %v1413
        %v1415 = vmul.f32 %v1312, 1.442695
        %v1416 = vpow.pop %v1415
        %v1417 = vmul.f32 %v1313, 1.442695
        %v1418 = vpow.pop %v1417
        %v1419 = vmul.f32 %v1314, 1.442695
        %v1420 = vpow.pop %v1419
        %v1421 = vmul.f32 %v1315, 1.442695
        %v1422 = vpow.pop %v1421
        %v1423 = vmul.f32 %v1316, 1.442695
        %v1424 = vpow.pop %v1423
        %v1425 = vmul.f32 %v1317, 1.442695
        %v1426 = vpow.pop %v1425
        %v1427 = vmul.f32 %v1318, 1.442695
        %v1428 = vpow.pop %v1427
        %v1429 = vmul.f32 %v1319, 1.442695
        %v1430 = vpow.pop %v1429
        %v1431 = vmul.f32 %v1320, 1.442695
        %v1432 = vpow.pop %v1431
        %v1433 = vmul.f32 %v1321, 1.442695
        %v1434 = vpow.pop %v1433
        %v1435 = vmul.f32 %v1322, 1.442695
        %v1436 = vpow.pop %v1435
        %v1437 = vmul.f32 %v1323, 1.442695
        %v1438 = vpow.pop %v1437
        %v1439 = vmul.f32 %v1324, 1.442695
        %v1440 = vpow.pop %v1439
        %v1441 = vmul.f32 %v1325, 1.442695
        %v1442 = vpow.pop %v1441
        %v1443 = vmul.f32 %v1326, 1.442695
        %v1444 = vpow.pop %v1443
        %v1445 = vmul.f32 %v1327, 1.442695
        %v1446 = vpow.pop %v1445
        %v1447 = vmul.f32 %v1328, 1.442695
        %v1448 = vpow.pop %v1447
        %v1449 = vmul.f32 %v1329, 1.442695
        %v1450 = vpow.pop %v1449
        %v1451 = vmul.f32 %v1330, 1.442695
        %v1452 = vpow.pop %v1451
        %v1453 = vmul.f32 %v1331, 1.442695
        %v1454 = vpow.pop %v1453
        %v1455 = vmul.f32 %v1332, 1.442695
        %v1456 = vpow.pop %v1455
        %v1457 = vmul.f32 %v1333, 1.442695
        %v1458 = vpow.pop %v1457
        %v1459 = vmul.f32 %v1334, 1.442695
        %v1460 = vpow.pop %v1459
        %v1461 = vmul.f32 %v1335, 1.442695
        %v1462 = vpow.pop %v1461
        %v1463 = vmul.f32 %v1336, 1.442695
        %v1464 = vpow.pop %v1463
        %v1465 = vadd.f32 %v1338, 0.0
        %v1466 = vadd.f32 %v1340, 0.0
        %v1467 = vadd.f32 %v1342, 0.0
        %v1468 = vadd.f32 %v1344, 0.0
        %v1469 = vadd.f32 %v1346, 0.0
        %v1470 = vadd.f32 %v1348, 0.0
        %v1471 = vadd.f32 %v1350, 0.0
        %v1472 = vadd.f32 %v1352, 0.0
        %v1473 = vadd.f32 %v1354, 0.0
        %v1474 = vadd.f32 %v1356, 0.0
        %v1475 = vadd.f32 %v1358, 0.0
        %v1476 = vadd.f32 %v1360, 0.0
        %v1477 = vadd.f32 %v1362, 0.0
        %v1478 = vadd.f32 %v1364, 0.0
        %v1479 = vadd.f32 %v1366, 0.0
        %v1480 = vadd.f32 %v1368, 0.0
        %v1481 = vadd.f32 %v1370, 0.0
        %v1482 = vadd.f32 %v1372, 0.0
        %v1483 = vadd.f32 %v1374, 0.0
        %v1484 = vadd.f32 %v1376, 0.0
        %v1485 = vadd.f32 %v1378, 0.0
        %v1486 = vadd.f32 %v1380, 0.0
        %v1487 = vadd.f32 %v1382, 0.0
        %v1488 = vadd.f32 %v1384, 0.0
        %v1489 = vadd.f32 %v1386, 0.0
        %v1490 = vadd.f32 %v1388, 0.0
        %v1491 = vadd.f32 %v1390, 0.0
        %v1492 = vadd.f32 %v1392, 0.0
        %v1493 = vadd.f32 %v1394, 0.0
        %v1494 = vadd.f32 %v1396, 0.0
        %v1495 = vadd.f32 %v1398, 0.0
        %v1496 = vadd.f32 %v1400, 0.0
        %v1497 = vadd.f32 %v1402, 0.0
        %v1498 = vadd.f32 %v1404, 0.0
        %v1499 = vadd.f32 %v1406, 0.0
        %v1500 = vadd.f32 %v1408, 0.0
        %v1501 = vadd.f32 %v1410, 0.0
        %v1502 = vadd.f32 %v1412, 0.0
        %v1503 = vadd.f32 %v1414, 0.0
        %v1504 = vadd.f32 %v1416, 0.0
        %v1505 = vadd.f32 %v1418, 0.0
        %v1506 = vadd.f32 %v1420, 0.0
        %v1507 = vadd.f32 %v1422, 0.0
        %v1508 = vadd.f32 %v1424, 0.0
        %v1509 = vadd.f32 %v1426, 0.0
        %v1510 = vadd.f32 %v1428, 0.0
        %v1511 = vadd.f32 %v1430, 0.0
        %v1512 = vadd.f32 %v1432, 0.0
        %v1513 = vadd.f32 %v1434, 0.0
        %v1514 = vadd.f32 %v1436, 0.0
        %v1515 = vadd.f32 %v1438, 0.0
        %v1516 = vadd.f32 %v1440, 0.0
        %v1517 = vadd.f32 %v1442, 0.0
        %v1518 = vadd.f32 %v1444, 0.0
        %v1519 = vadd.f32 %v1446, 0.0
        %v1520 = vadd.f32 %v1448, 0.0
        %v1521 = vadd.f32 %v1450, 0.0
        %v1522 = vadd.f32 %v1452, 0.0
        %v1523 = vadd.f32 %v1454, 0.0
        %v1524 = vadd.f32 %v1456, 0.0
        %v1525 = vadd.f32 %v1458, 0.0
        %v1526 = vadd.f32 %v1460, 0.0
        %v1527 = vadd.f32 %v1462, 0.0
        %v1528 = vadd.f32 %v1464, 0.0
        %v1529 = vmul.f32 %v1209, -2.5
        %v1530 = vmul.f32 %v1210, -2.5
        %v1531 = vmul.f32 %v1211, -2.5
        %v1532 = vmul.f32 %v1212, -2.5
        %v1533 = vmul.f32 %v1213, -2.5
        %v1534 = vmul.f32 %v1214, -2.5
        %v1535 = vmul.f32 %v1215, -2.5
        %v1536 = vmul.f32 %v1216, -2.5
        %v1537 = vmul.f32 %v1217, -2.5
        %v1538 = vmul.f32 %v1218, -2.5
        %v1539 = vmul.f32 %v1219, -2.5
        %v1540 = vmul.f32 %v1220, -2.5
        %v1541 = vmul.f32 %v1221, -2.5
        %v1542 = vmul.f32 %v1222, -2.5
        %v1543 = vmul.f32 %v1223, -2.5
        %v1544 = vmul.f32 %v1224, -2.5
        %v1545 = vmul.f32 %v1225, -2.5
        %v1546 = vmul.f32 %v1226, -2.5
        %v1547 = vmul.f32 %v1227, -2.5
        %v1548 = vmul.f32 %v1228, -2.5
        %v1549 = vmul.f32 %v1229, -2.5
        %v1550 = vmul.f32 %v1230, -2.5
        %v1551 = vmul.f32 %v1231, -2.5
        %v1552 = vmul.f32 %v1232, -2.5
        %v1553 = vmul.f32 %v1233, -2.5
        %v1554 = vmul.f32 %v1234, -2.5
        %v1555 = vmul.f32 %v1235, -2.5
        %v1556 = vmul.f32 %v1236, -2.5
        %v1557 = vmul.f32 %v1237, -2.5
        %v1558 = vmul.f32 %v1238, -2.5
        %v1559 = vmul.f32 %v1239, -2.5
        %v1560 = vmul.f32 %v1240, -2.5
        %v1561 = vmul.f32 %v1241, -2.5
        %v1562 = vmul.f32 %v1242, -2.5
        %v1563 = vmul.f32 %v1243, -2.5
        %v1564 = vmul.f32 %v1244, -2.5
        %v1565 = vmul.f32 %v1245, -2.5
        %v1566 = vmul.f32 %v1246, -2.5
        %v1567 = vmul.f32 %v1247, -2.5
        %v1568 = vmul.f32 %v1248, -2.5
        %v1569 = vmul.f32 %v1249, -2.5
        %v1570 = vmul.f32 %v1250, -2.5
        %v1571 = vmul.f32 %v1251, -2.5
        %v1572 = vmul.f32 %v1252, -2.5
        %v1573 = vmul.f32 %v1253, -2.5
        %v1574 = vmul.f32 %v1254, -2.5
        %v1575 = vmul.f32 %v1255, -2.5
        %v1576 = vmul.f32 %v1256, -2.5
        %v1577 = vmul.f32 %v1257, -2.5
        %v1578 = vmul.f32 %v1258, -2.5
        %v1579 = vmul.f32 %v1259, -2.5
        %v1580 = vmul.f32 %v1260, -2.5
        %v1581 = vmul.f32 %v1261, -2.5
        %v1582 = vmul.f32 %v1262, -2.5
        %v1583 = vmul.f32 %v1263, -2.5
        %v1584 = vmul.f32 %v1264, -2.5
        %v1585 = vmul.f32 %v1265, -2.5
        %v1586 = vmul.f32 %v1266, -2.5
        %v1587 = vmul.f32 %v1267, -2.5
        %v1588 = vmul.f32 %v1268, -2.5
        %v1589 = vmul.f32 %v1269, -2.5
        %v1590 = vmul.f32 %v1270, -2.5
        %v1591 = vmul.f32 %v1271, -2.5
        %v1592 = vmul.f32 %v1272, -2.5
        %v1593 = vmul.f32 %v1529, 1.442695
        %v1594 = vpow.pop %v1593
        %v1595 = vmul.f32 %v1530, 1.442695
        %v1596 = vpow.pop %v1595
        %v1597 = vmul.f32 %v1531, 1.442695
        %v1598 = vpow.pop %v1597
        %v1599 = vmul.f32 %v1532, 1.442695
        %v1600 = vpow.pop %v1599
        %v1601 = vmul.f32 %v1533, 1.442695
        %v1602 = vpow.pop %v1601
        %v1603 = vmul.f32 %v1534, 1.442695
        %v1604 = vpow.pop %v1603
        %v1605 = vmul.f32 %v1535, 1.442695
        %v1606 = vpow.pop %v1605
        %v1607 = vmul.f32 %v1536, 1.442695
        %v1608 = vpow.pop %v1607
        %v1609 = vmul.f32 %v1537, 1.442695
        %v1610 = vpow.pop %v1609
        %v1611 = vmul.f32 %v1538, 1.442695
        %v1612 = vpow.pop %v1611
        %v1613 = vmul.f32 %v1539, 1.442695
        %v1614 = vpow.pop %v1613
        %v1615 = vmul.f32 %v1540, 1.442695
        %v1616 = vpow.pop %v1615
        %v1617 = vmul.f32 %v1541, 1.442695
        %v1618 = vpow.pop %v1617
        %v1619 = vmul.f32 %v1542, 1.442695
        %v1620 = vpow.pop %v1619
        %v1621 = vmul.f32 %v1543, 1.442695
        %v1622 = vpow.pop %v1621
        %v1623 = vmul.f32 %v1544, 1.442695
        %v1624 = vpow.pop %v1623
        %v1625 = vmul.f32 %v1545, 1.442695
        %v1626 = vpow.pop %v1625
        %v1627 = vmul.f32 %v1546, 1.442695
        %v1628 = vpow.pop %v1627
        %v1629 = vmul.f32 %v1547, 1.442695
        %v1630 = vpow.pop %v1629
        %v1631 = vmul.f32 %v1548, 1.442695
        %v1632 = vpow.pop %v1631
        %v1633 = vmul.f32 %v1549, 1.442695
        %v1634 = vpow.pop %v1633
        %v1635 = vmul.f32 %v1550, 1.442695
        %v1636 = vpow.pop %v1635
        %v1637 = vmul.f32 %v1551, 1.442695
        %v1638 = vpow.pop %v1637
        %v1639 = vmul.f32 %v1552, 1.442695
        %v1640 = vpow.pop %v1639
        %v1641 = vmul.f32 %v1553, 1.442695
        %v1642 = vpow.pop %v1641
        %v1643 = vmul.f32 %v1554, 1.442695
        %v1644 = vpow.pop %v1643
        %v1645 = vmul.f32 %v1555, 1.442695
        %v1646 = vpow.pop %v1645
        %v1647 = vmul.f32 %v1556, 1.442695
        %v1648 = vpow.pop %v1647
        %v1649 = vmul.f32 %v1557, 1.442695
        %v1650 = vpow.pop %v1649
        %v1651 = vmul.f32 %v1558, 1.442695
        %v1652 = vpow.pop %v1651
        %v1653 = vmul.f32 %v1559, 1.442695
        %v1654 = vpow.pop %v1653
        %v1655 = vmul.f32 %v1560, 1.442695
        %v1656 = vpow.pop %v1655
        %v1657 = vmul.f32 %v1561, 1.442695
        %v1658 = vpow.pop %v1657
        %v1659 = vmul.f32 %v1562, 1.442695
        %v1660 = vpow.pop %v1659
        %v1661 = vmul.f32 %v1563, 1.442695
        %v1662 = vpow.pop %v1661
        %v1663 = vmul.f32 %v1564, 1.442695
        %v1664 = vpow.pop %v1663
        %v1665 = vmul.f32 %v1565, 1.442695
        %v1666 = vpow.pop %v1665
        %v1667 = vmul.f32 %v1566, 1.442695
        %v1668 = vpow.pop %v1667
        %v1669 = vmul.f32 %v1567, 1.442695
        %v1670 = vpow.pop %v1669
        %v1671 = vmul.f32 %v1568, 1.442695
        %v1672 = vpow.pop %v1671
        %v1673 = vmul.f32 %v1569, 1.442695
        %v1674 = vpow.pop %v1673
        %v1675 = vmul.f32 %v1570, 1.442695
        %v1676 = vpow.pop %v1675
        %v1677 = vmul.f32 %v1571, 1.442695
        %v1678 = vpow.pop %v1677
        %v1679 = vmul.f32 %v1572, 1.442695
        %v1680 = vpow.pop %v1679
        %v1681 = vmul.f32 %v1573, 1.442695
        %v1682 = vpow.pop %v1681
        %v1683 = vmul.f32 %v1574, 1.442695
        %v1684 = vpow.pop %v1683
        %v1685 = vmul.f32 %v1575, 1.442695
        %v1686 = vpow.pop %v1685
        %v1687 = vmul.f32 %v1576, 1.442695
        %v1688 = vpow.pop %v1687
        %v1689 = vmul.f32 %v1577, 1.442695
        %v1690 = vpow.pop %v1689
        %v1691 = vmul.f32 %v1578, 1.442695
        %v1692 = vpow.pop %v1691
        %v1693 = vmul.f32 %v1579, 1.442695
        %v1694 = vpow.pop %v1693
        %v1695 = vmul.f32 %v1580, 1.442695
        %v1696 = vpow.pop %v1695
        %v1697 = vmul.f32 %v1581, 1.442695
        %v1698 = vpow.pop %v1697
        %v1699 = vmul.f32 %v1582, 1.442695
        %v1700 = vpow.pop %v1699
        %v1701 = vmul.f32 %v1583, 1.442695
        %v1702 = vpow.pop %v1701
        %v1703 = vmul.f32 %v1584, 1.442695
        %v1704 = vpow.pop %v1703
        %v1705 = vmul.f32 %v1585, 1.442695
        %v1706 = vpow.pop %v1705
        %v1707 = vmul.f32 %v1586, 1.442695
        %v1708 = vpow.pop %v1707
        %v1709 = vmul.f32 %v1587, 1.442695
        %v1710 = vpow.pop %v1709
        %v1711 = vmul.f32 %v1588, 1.442695
        %v1712 = vpow.pop %v1711
        %v1713 = vmul.f32 %v1589, 1.442695
        %v1714 = vpow.pop %v1713
        %v1715 = vmul.f32 %v1590, 1.442695
        %v1716 = vpow.pop %v1715
        %v1717 = vmul.f32 %v1591, 1.442695
        %v1718 = vpow.pop %v1717
        %v1719 = vmul.f32 %v1592, 1.442695
        %v1720 = vpow.pop %v1719
        %v1721 = vadd.f32 %v1465, %v1594
        %v1722 = vadd.f32 %v1466, %v1596
        %v1723 = vadd.f32 %v1467, %v1598
        %v1724 = vadd.f32 %v1468, %v1600
        %v1725 = vadd.f32 %v1469, %v1602
        %v1726 = vadd.f32 %v1470, %v1604
        %v1727 = vadd.f32 %v1471, %v1606
        %v1728 = vadd.f32 %v1472, %v1608
        %v1729 = vadd.f32 %v1473, %v1610
        %v1730 = vadd.f32 %v1474, %v1612
        %v1731 = vadd.f32 %v1475, %v1614
        %v1732 = vadd.f32 %v1476, %v1616
        %v1733 = vadd.f32 %v1477, %v1618
        %v1734 = vadd.f32 %v1478, %v1620
        %v1735 = vadd.f32 %v1479, %v1622
        %v1736 = vadd.f32 %v1480, %v1624
        %v1737 = vadd.f32 %v1481, %v1626
        %v1738 = vadd.f32 %v1482, %v1628
        %v1739 = vadd.f32 %v1483, %v1630
        %v1740 = vadd.f32 %v1484, %v1632
        %v1741 = vadd.f32 %v1485, %v1634
        %v1742 = vadd.f32 %v1486, %v1636
        %v1743 = vadd.f32 %v1487, %v1638
        %v1744 = vadd.f32 %v1488, %v1640
        %v1745 = vadd.f32 %v1489, %v1642
        %v1746 = vadd.f32 %v1490, %v1644
        %v1747 = vadd.f32 %v1491, %v1646
        %v1748 = vadd.f32 %v1492, %v1648
        %v1749 = vadd.f32 %v1493, %v1650
        %v1750 = vadd.f32 %v1494, %v1652
        %v1751 = vadd.f32 %v1495, %v1654
        %v1752 = vadd.f32 %v1496, %v1656
        %v1753 = vadd.f32 %v1497, %v1658
        %v1754 = vadd.f32 %v1498, %v1660
        %v1755 = vadd.f32 %v1499, %v1662
        %v1756 = vadd.f32 %v1500, %v1664
        %v1757 = vadd.f32 %v1501, %v1666
        %v1758 = vadd.f32 %v1502, %v1668
        %v1759 = vadd.f32 %v1503, %v1670
        %v1760 = vadd.f32 %v1504, %v1672
        %v1761 = vadd.f32 %v1505, %v1674
        %v1762 = vadd.f32 %v1506, %v1676
        %v1763 = vadd.f32 %v1507, %v1678
        %v1764 = vadd.f32 %v1508, %v1680
        %v1765 = vadd.f32 %v1509, %v1682
        %v1766 = vadd.f32 %v1510, %v1684
        %v1767 = vadd.f32 %v1511, %v1686
        %v1768 = vadd.f32 %v1512, %v1688
        %v1769 = vadd.f32 %v1513, %v1690
        %v1770 = vadd.f32 %v1514, %v1692
        %v1771 = vadd.f32 %v1515, %v1694
        %v1772 = vadd.f32 %v1516, %v1696
        %v1773 = vadd.f32 %v1517, %v1698
        %v1774 = vadd.f32 %v1518, %v1700
        %v1775 = vadd.f32 %v1519, %v1702
        %v1776 = vadd.f32 %v1520, %v1704
        %v1777 = vadd.f32 %v1521, %v1706
        %v1778 = vadd.f32 %v1522, %v1708
        %v1779 = vadd.f32 %v1523, %v1710
        %v1780 = vadd.f32 %v1524, %v1712
        %v1781 = vadd.f32 %v1525, %v1714
        %v1782 = vadd.f32 %v1526, %v1716
        %v1783 = vadd.f32 %v1527, %v1718
        %v1784 = vadd.f32 %v1528, %v1720
        %v1785 = vmul.f32 %v1209, -0.5555556
        %v1786 = vmul.f32 %v1210, -0.5555556
        %v1787 = vmul.f32 %v1211, -0.5555556
        %v1788 = vmul.f32 %v1212, -0.5555556
        %v1789 = vmul.f32 %v1213, -0.5555556
        %v1790 = vmul.f32 %v1214, -0.5555556
        %v1791 = vmul.f32 %v1215, -0.5555556
        %v1792 = vmul.f32 %v1216, -0.5555556
        %v1793 = vmul.f32 %v1217, -0.5555556
        %v1794 = vmul.f32 %v1218, -0.5555556
        %v1795 = vmul.f32 %v1219, -0.5555556
        %v1796 = vmul.f32 %v1220, -0.5555556
        %v1797 = vmul.f32 %v1221, -0.5555556
        %v1798 = vmul.f32 %v1222, -0.5555556
        %v1799 = vmul.f32 %v1223, -0.5555556
        %v1800 = vmul.f32 %v1224, -0.5555556
        %v1801 = vmul.f32 %v1225, -0.5555556
        %v1802 = vmul.f32 %v1226, -0.5555556
        %v1803 = vmul.f32 %v1227, -0.5555556
        %v1804 = vmul.f32 %v1228, -0.5555556
        %v1805 = vmul.f32 %v1229, -0.5555556
        %v1806 = vmul.f32 %v1230, -0.5555556
        %v1807 = vmul.f32 %v1231, -0.5555556
        %v1808 = vmul.f32 %v1232, -0.5555556
        %v1809 = vmul.f32 %v1233, -0.5555556
        %v1810 = vmul.f32 %v1234, -0.5555556
        %v1811 = vmul.f32 %v1235, -0.5555556
        %v1812 = vmul.f32 %v1236, -0.5555556
        %v1813 = vmul.f32 %v1237, -0.5555556
        %v1814 = vmul.f32 %v1238, -0.5555556
        %v1815 = vmul.f32 %v1239, -0.5555556
        %v1816 = vmul.f32 %v1240, -0.5555556
        %v1817 = vmul.f32 %v1241, -0.5555556
        %v1818 = vmul.f32 %v1242, -0.5555556
        %v1819 = vmul.f32 %v1243, -0.5555556
        %v1820 = vmul.f32 %v1244, -0.5555556
        %v1821 = vmul.f32 %v1245, -0.5555556
        %v1822 = vmul.f32 %v1246, -0.5555556
        %v1823 = vmul.f32 %v1247, -0.5555556
        %v1824 = vmul.f32 %v1248, -0.5555556
        %v1825 = vmul.f32 %v1249, -0.5555556
        %v1826 = vmul.f32 %v1250, -0.5555556
        %v1827 = vmul.f32 %v1251, -0.5555556
        %v1828 = vmul.f32 %v1252, -0.5555556
        %v1829 = vmul.f32 %v1253, -0.5555556
        %v1830 = vmul.f32 %v1254, -0.5555556
        %v1831 = vmul.f32 %v1255, -0.5555556
        %v1832 = vmul.f32 %v1256, -0.5555556
        %v1833 = vmul.f32 %v1257, -0.5555556
        %v1834 = vmul.f32 %v1258, -0.5555556
        %v1835 = vmul.f32 %v1259, -0.5555556
        %v1836 = vmul.f32 %v1260, -0.5555556
        %v1837 = vmul.f32 %v1261, -0.5555556
        %v1838 = vmul.f32 %v1262, -0.5555556
        %v1839 = vmul.f32 %v1263, -0.5555556
        %v1840 = vmul.f32 %v1264, -0.5555556
        %v1841 = vmul.f32 %v1265, -0.5555556
        %v1842 = vmul.f32 %v1266, -0.5555556
        %v1843 = vmul.f32 %v1267, -0.5555556
        %v1844 = vmul.f32 %v1268, -0.5555556
        %v1845 = vmul.f32 %v1269, -0.5555556
        %v1846 = vmul.f32 %v1270, -0.5555556
        %v1847 = vmul.f32 %v1271, -0.5555556
        %v1848 = vmul.f32 %v1272, -0.5555556
        %v1849 = vmul.f32 %v1785, 1.442695
        %v1850 = vpow.pop %v1849
        %v1851 = vmul.f32 %v1786, 1.442695
        %v1852 = vpow.pop %v1851
        %v1853 = vmul.f32 %v1787, 1.442695
        %v1854 = vpow.pop %v1853
        %v1855 = vmul.f32 %v1788, 1.442695
        %v1856 = vpow.pop %v1855
        %v1857 = vmul.f32 %v1789, 1.442695
        %v1858 = vpow.pop %v1857
        %v1859 = vmul.f32 %v1790, 1.442695
        %v1860 = vpow.pop %v1859
        %v1861 = vmul.f32 %v1791, 1.442695
        %v1862 = vpow.pop %v1861
        %v1863 = vmul.f32 %v1792, 1.442695
        %v1864 = vpow.pop %v1863
        %v1865 = vmul.f32 %v1793, 1.442695
        %v1866 = vpow.pop %v1865
        %v1867 = vmul.f32 %v1794, 1.442695
        %v1868 = vpow.pop %v1867
        %v1869 = vmul.f32 %v1795, 1.442695
        %v1870 = vpow.pop %v1869
        %v1871 = vmul.f32 %v1796, 1.442695
        %v1872 = vpow.pop %v1871
        %v1873 = vmul.f32 %v1797, 1.442695
        %v1874 = vpow.pop %v1873
        %v1875 = vmul.f32 %v1798, 1.442695
        %v1876 = vpow.pop %v1875
        %v1877 = vmul.f32 %v1799, 1.442695
        %v1878 = vpow.pop %v1877
        %v1879 = vmul.f32 %v1800, 1.442695
        %v1880 = vpow.pop %v1879
        %v1881 = vmul.f32 %v1801, 1.442695
        %v1882 = vpow.pop %v1881
        %v1883 = vmul.f32 %v1802, 1.442695
        %v1884 = vpow.pop %v1883
        %v1885 = vmul.f32 %v1803, 1.442695
        %v1886 = vpow.pop %v1885
        %v1887 = vmul.f32 %v1804, 1.442695
        %v1888 = vpow.pop %v1887
        %v1889 = vmul.f32 %v1805, 1.442695
        %v1890 = vpow.pop %v1889
        %v1891 = vmul.f32 %v1806, 1.442695
        %v1892 = vpow.pop %v1891
        %v1893 = vmul.f32 %v1807, 1.442695
        %v1894 = vpow.pop %v1893
        %v1895 = vmul.f32 %v1808, 1.442695
        %v1896 = vpow.pop %v1895
        %v1897 = vmul.f32 %v1809, 1.442695
        %v1898 = vpow.pop %v1897
        %v1899 = vmul.f32 %v1810, 1.442695
        %v1900 = vpow.pop %v1899
        %v1901 = vmul.f32 %v1811, 1.442695
        %v1902 = vpow.pop %v1901
        %v1903 = vmul.f32 %v1812, 1.442695
        %v1904 = vpow.pop %v1903
        %v1905 = vmul.f32 %v1813, 1.442695
        %v1906 = vpow.pop %v1905
        %v1907 = vmul.f32 %v1814, 1.442695
        %v1908 = vpow.pop %v1907
        %v1909 = vmul.f32 %v1815, 1.442695
        %v1910 = vpow.pop %v1909
        %v1911 = vmul.f32 %v1816, 1.442695
        %v1912 = vpow.pop %v1911
        %v1913 = vmul.f32 %v1817, 1.442695
        %v1914 = vpow.pop %v1913
        %v1915 = vmul.f32 %v1818, 1.442695
        %v1916 = vpow.pop %v1915
        %v1917 = vmul.f32 %v1819, 1.442695
        %v1918 = vpow.pop %v1917
        %v1919 = vmul.f32 %v1820, 1.442695
        %v1920 = vpow.pop %v1919
        %v1921 = vmul.f32 %v1821, 1.442695
        %v1922 = vpow.pop %v1921
        %v1923 = vmul.f32 %v1822, 1.442695
        %v1924 = vpow.pop %v1923
        %v1925 = vmul.f32 %v1823, 1.442695
        %v1926 = vpow.pop %v1925
        %v1927 = vmul.f32 %v1824, 1.442695
        %v1928 = vpow.pop %v1927
        %v1929 = vmul.f32 %v1825, 1.442695
        %v1930 = vpow.pop %v1929
        %v1931 = vmul.f32 %v1826, 1.442695
        %v1932 = vpow.pop %v1931
        %v1933 = vmul.f32 %v1827, 1.442695
        %v1934 = vpow.pop %v1933
        %v1935 = vmul.f32 %v1828, 1.442695
        %v1936 = vpow.pop %v1935
        %v1937 = vmul.f32 %v1829, 1.442695
        %v1938 = vpow.pop %v1937
        %v1939 = vmul.f32 %v1830, 1.442695
        %v1940 = vpow.pop %v1939
        %v1941 = vmul.f32 %v1831, 1.442695
        %v1942 = vpow.pop %v1941
        %v1943 = vmul.f32 %v1832, 1.442695
        %v1944 = vpow.pop %v1943
        %v1945 = vmul.f32 %v1833, 1.442695
        %v1946 = vpow.pop %v1945
        %v1947 = vmul.f32 %v1834, 1.442695
        %v1948 = vpow.pop %v1947
        %v1949 = vmul.f32 %v1835, 1.442695
        %v1950 = vpow.pop %v1949
        %v1951 = vmul.f32 %v1836, 1.442695
        %v1952 = vpow.pop %v1951
        %v1953 = vmul.f32 %v1837, 1.442695
        %v1954 = vpow.pop %v1953
        %v1955 = vmul.f32 %v1838, 1.442695
        %v1956 = vpow.pop %v1955
        %v1957 = vmul.f32 %v1839, 1.442695
        %v1958 = vpow.pop %v1957
        %v1959 = vmul.f32 %v1840, 1.442695
        %v1960 = vpow.pop %v1959
        %v1961 = vmul.f32 %v1841, 1.442695
        %v1962 = vpow.pop %v1961
        %v1963 = vmul.f32 %v1842, 1.442695
        %v1964 = vpow.pop %v1963
        %v1965 = vmul.f32 %v1843, 1.442695
        %v1966 = vpow.pop %v1965
        %v1967 = vmul.f32 %v1844, 1.442695
        %v1968 = vpow.pop %v1967
        %v1969 = vmul.f32 %v1845, 1.442695
        %v1970 = vpow.pop %v1969
        %v1971 = vmul.f32 %v1846, 1.442695
        %v1972 = vpow.pop %v1971
        %v1973 = vmul.f32 %v1847, 1.442695
        %v1974 = vpow.pop %v1973
        %v1975 = vmul.f32 %v1848, 1.442695
        %v1976 = vpow.pop %v1975
        %v1977 = vadd.f32 %v1721, %v1850
        %v1978 = vadd.f32 %v1722, %v1852
        %v1979 = vadd.f32 %v1723, %v1854
        %v1980 = vadd.f32 %v1724, %v1856
        %v1981 = vadd.f32 %v1725, %v1858
        %v1982 = vadd.f32 %v1726, %v1860
        %v1983 = vadd.f32 %v1727, %v1862
        %v1984 = vadd.f32 %v1728, %v1864
        %v1985 = vadd.f32 %v1729, %v1866
        %v1986 = vadd.f32 %v1730, %v1868
        %v1987 = vadd.f32 %v1731, %v1870
        %v1988 = vadd.f32 %v1732, %v1872
        %v1989 = vadd.f32 %v1733, %v1874
        %v1990 = vadd.f32 %v1734, %v1876
        %v1991 = vadd.f32 %v1735, %v1878
        %v1992 = vadd.f32 %v1736, %v1880
        %v1993 = vadd.f32 %v1737, %v1882
        %v1994 = vadd.f32 %v1738, %v1884
        %v1995 = vadd.f32 %v1739, %v1886
        %v1996 = vadd.f32 %v1740, %v1888
        %v1997 = vadd.f32 %v1741, %v1890
        %v1998 = vadd.f32 %v1742, %v1892
        %v1999 = vadd.f32 %v1743, %v1894
        %v2000 = vadd.f32 %v1744, %v1896
        %v2001 = vadd.f32 %v1745, %v1898
        %v2002 = vadd.f32 %v1746, %v1900
        %v2003 = vadd.f32 %v1747, %v1902
        %v2004 = vadd.f32 %v1748, %v1904
        %v2005 = vadd.f32 %v1749, %v1906
        %v2006 = vadd.f32 %v1750, %v1908
        %v2007 = vadd.f32 %v1751, %v1910
        %v2008 = vadd.f32 %v1752, %v1912
        %v2009 = vadd.f32 %v1753, %v1914
        %v2010 = vadd.f32 %v1754, %v1916
        %v2011 = vadd.f32 %v1755, %v1918
        %v2012 = vadd.f32 %v1756, %v1920
        %v2013 = vadd.f32 %v1757, %v1922
        %v2014 = vadd.f32 %v1758, %v1924
        %v2015 = vadd.f32 %v1759, %v1926
        %v2016 = vadd.f32 %v1760, %v1928
        %v2017 = vadd.f32 %v1761, %v1930
        %v2018 = vadd.f32 %v1762, %v1932
        %v2019 = vadd.f32 %v1763, %v1934
        %v2020 = vadd.f32 %v1764, %v1936
        %v2021 = vadd.f32 %v1765, %v1938
        %v2022 = vadd.f32 %v1766, %v1940
        %v2023 = vadd.f32 %v1767, %v1942
        %v2024 = vadd.f32 %v1768, %v1944
        %v2025 = vadd.f32 %v1769, %v1946
        %v2026 = vadd.f32 %v1770, %v1948
        %v2027 = vadd.f32 %v1771, %v1950
        %v2028 = vadd.f32 %v1772, %v1952
        %v2029 = vadd.f32 %v1773, %v1954
        %v2030 = vadd.f32 %v1774, %v1956
        %v2031 = vadd.f32 %v1775, %v1958
        %v2032 = vadd.f32 %v1776, %v1960
        %v2033 = vadd.f32 %v1777, %v1962
        %v2034 = vadd.f32 %v1778, %v1964
        %v2035 = vadd.f32 %v1779, %v1966
        %v2036 = vadd.f32 %v1780, %v1968
        %v2037 = vadd.f32 %v1781, %v1970
        %v2038 = vadd.f32 %v1782, %v1972
        %v2039 = vadd.f32 %v1783, %v1974
        %v2040 = vadd.f32 %v1784, %v1976
        %v2041 = vmul.f32 %v1209, -0.125
        %v2042 = vmul.f32 %v1210, -0.125
        %v2043 = vmul.f32 %v1211, -0.125
        %v2044 = vmul.f32 %v1212, -0.125
        %v2045 = vmul.f32 %v1213, -0.125
        %v2046 = vmul.f32 %v1214, -0.125
        %v2047 = vmul.f32 %v1215, -0.125
        %v2048 = vmul.f32 %v1216, -0.125
        %v2049 = vmul.f32 %v1217, -0.125
        %v2050 = vmul.f32 %v1218, -0.125
        %v2051 = vmul.f32 %v1219, -0.125
        %v2052 = vmul.f32 %v1220, -0.125
        %v2053 = vmul.f32 %v1221, -0.125
        %v2054 = vmul.f32 %v1222, -0.125
        %v2055 = vmul.f32 %v1223, -0.125
        %v2056 = vmul.f32 %v1224, -0.125
        %v2057 = vmul.f32 %v1225, -0.125
        %v2058 = vmul.f32 %v1226, -0.125
        %v2059 = vmul.f32 %v1227, -0.125
        %v2060 = vmul.f32 %v1228, -0.125
        %v2061 = vmul.f32 %v1229, -0.125
        %v2062 = vmul.f32 %v1230, -0.125
        %v2063 = vmul.f32 %v1231, -0.125
        %v2064 = vmul.f32 %v1232, -0.125
        %v2065 = vmul.f32 %v1233, -0.125
        %v2066 = vmul.f32 %v1234, -0.125
        %v2067 = vmul.f32 %v1235, -0.125
        %v2068 = vmul.f32 %v1236, -0.125
        %v2069 = vmul.f32 %v1237, -0.125
        %v2070 = vmul.f32 %v1238, -0.125
        %v2071 = vmul.f32 %v1239, -0.125
        %v2072 = vmul.f32 %v1240, -0.125
        %v2073 = vmul.f32 %v1241, -0.125
        %v2074 = vmul.f32 %v1242, -0.125
        %v2075 = vmul.f32 %v1243, -0.125
        %v2076 = vmul.f32 %v1244, -0.125
        %v2077 = vmul.f32 %v1245, -0.125
        %v2078 = vmul.f32 %v1246, -0.125
        %v2079 = vmul.f32 %v1247, -0.125
        %v2080 = vmul.f32 %v1248, -0.125
        %v2081 = vmul.f32 %v1249, -0.125
        %v2082 = vmul.f32 %v1250, -0.125
        %v2083 = vmul.f32 %v1251, -0.125
        %v2084 = vmul.f32 %v1252, -0.125
        %v2085 = vmul.f32 %v1253, -0.125
        %v2086 = vmul.f32 %v1254, -0.125
        %v2087 = vmul.f32 %v1255, -0.125
        %v2088 = vmul.f32 %v1256, -0.125
        %v2089 = vmul.f32 %v1257, -0.125
        %v2090 = vmul.f32 %v1258, -0.125
        %v2091 = vmul.f32 %v1259, -0.125
        %v2092 = vmul.f32 %v1260, -0.125
        %v2093 = vmul.f32 %v1261, -0.125
        %v2094 = vmul.f32 %v1262, -0.125
        %v2095 = vmul.f32 %v1263, -0.125
        %v2096 = vmul.f32 %v1264, -0.125
        %v2097 = vmul.f32 %v1265, -0.125
        %v2098 = vmul.f32 %v1266, -0.125
        %v2099 = vmul.f32 %v1267, -0.125
        %v2100 = vmul.f32 %v1268, -0.125
        %v2101 = vmul.f32 %v1269, -0.125
        %v2102 = vmul.f32 %v1270, -0.125
        %v2103 = vmul.f32 %v1271, -0.125
        %v2104 = vmul.f32 %v1272, -0.125
        %v2105 = vmul.f32 %v2041, 1.442695
        %v2106 = vpow.pop %v2105
        %v2107 = vmul.f32 %v2042, 1.442695
        %v2108 = vpow.pop %v2107
        %v2109 = vmul.f32 %v2043, 1.442695
        %v2110 = vpow.pop %v2109
        %v2111 = vmul.f32 %v2044, 1.442695
        %v2112 = vpow.pop %v2111
        %v2113 = vmul.f32 %v2045, 1.442695
        %v2114 = vpow.pop %v2113
        %v2115 = vmul.f32 %v2046, 1.442695
        %v2116 = vpow.pop %v2115
        %v2117 = vmul.f32 %v2047, 1.442695
        %v2118 = vpow.pop %v2117
        %v2119 = vmul.f32 %v2048, 1.442695
        %v2120 = vpow.pop %v2119
        %v2121 = vmul.f32 %v2049, 1.442695
        %v2122 = vpow.pop %v2121
        %v2123 = vmul.f32 %v2050, 1.442695
        %v2124 = vpow.pop %v2123
        %v2125 = vmul.f32 %v2051, 1.442695
        %v2126 = vpow.pop %v2125
        %v2127 = vmul.f32 %v2052, 1.442695
        %v2128 = vpow.pop %v2127
        %v2129 = vmul.f32 %v2053, 1.442695
        %v2130 = vpow.pop %v2129
        %v2131 = vmul.f32 %v2054, 1.442695
        %v2132 = vpow.pop %v2131
        %v2133 = vmul.f32 %v2055, 1.442695
        %v2134 = vpow.pop %v2133
        %v2135 = vmul.f32 %v2056, 1.442695
        %v2136 = vpow.pop %v2135
        %v2137 = vmul.f32 %v2057, 1.442695
        %v2138 = vpow.pop %v2137
        %v2139 = vmul.f32 %v2058, 1.442695
        %v2140 = vpow.pop %v2139
        %v2141 = vmul.f32 %v2059, 1.442695
        %v2142 = vpow.pop %v2141
        %v2143 = vmul.f32 %v2060, 1.442695
        %v2144 = vpow.pop %v2143
        %v2145 = vmul.f32 %v2061, 1.442695
        %v2146 = vpow.pop %v2145
        %v2147 = vmul.f32 %v2062, 1.442695
        %v2148 = vpow.pop %v2147
        %v2149 = vmul.f32 %v2063, 1.442695
        %v2150 = vpow.pop %v2149
        %v2151 = vmul.f32 %v2064, 1.442695
        %v2152 = vpow.pop %v2151
        %v2153 = vmul.f32 %v2065, 1.442695
        %v2154 = vpow.pop %v2153
        %v2155 = vmul.f32 %v2066, 1.442695
        %v2156 = vpow.pop %v2155
        %v2157 = vmul.f32 %v2067, 1.442695
        %v2158 = vpow.pop %v2157
        %v2159 = vmul.f32 %v2068, 1.442695
        %v2160 = vpow.pop %v2159
        %v2161 = vmul.f32 %v2069, 1.442695
        %v2162 = vpow.pop %v2161
        %v2163 = vmul.f32 %v2070, 1.442695
        %v2164 = vpow.pop %v2163
        %v2165 = vmul.f32 %v2071, 1.442695
        %v2166 = vpow.pop %v2165
        %v2167 = vmul.f32 %v2072, 1.442695
        %v2168 = vpow.pop %v2167
        %v2169 = vmul.f32 %v2073, 1.442695
        %v2170 = vpow.pop %v2169
        %v2171 = vmul.f32 %v2074, 1.442695
        %v2172 = vpow.pop %v2171
        %v2173 = vmul.f32 %v2075, 1.442695
        %v2174 = vpow.pop %v2173
        %v2175 = vmul.f32 %v2076, 1.442695
        %v2176 = vpow.pop %v2175
        %v2177 = vmul.f32 %v2077, 1.442695
        %v2178 = vpow.pop %v2177
        %v2179 = vmul.f32 %v2078, 1.442695
        %v2180 = vpow.pop %v2179
        %v2181 = vmul.f32 %v2079, 1.442695
        %v2182 = vpow.pop %v2181
        %v2183 = vmul.f32 %v2080, 1.442695
        %v2184 = vpow.pop %v2183
        %v2185 = vmul.f32 %v2081, 1.442695
        %v2186 = vpow.pop %v2185
        %v2187 = vmul.f32 %v2082, 1.442695
        %v2188 = vpow.pop %v2187
        %v2189 = vmul.f32 %v2083, 1.442695
        %v2190 = vpow.pop %v2189
        %v2191 = vmul.f32 %v2084, 1.442695
        %v2192 = vpow.pop %v2191
        %v2193 = vmul.f32 %v2085, 1.442695
        %v2194 = vpow.pop %v2193
        %v2195 = vmul.f32 %v2086, 1.442695
        %v2196 = vpow.pop %v2195
        %v2197 = vmul.f32 %v2087, 1.442695
        %v2198 = vpow.pop %v2197
        %v2199 = vmul.f32 %v2088, 1.442695
        %v2200 = vpow.pop %v2199
        %v2201 = vmul.f32 %v2089, 1.442695
        %v2202 = vpow.pop %v2201
        %v2203 = vmul.f32 %v2090, 1.442695
        %v2204 = vpow.pop %v2203
        %v2205 = vmul.f32 %v2091, 1.442695
        %v2206 = vpow.pop %v2205
        %v2207 = vmul.f32 %v2092, 1.442695
        %v2208 = vpow.pop %v2207
        %v2209 = vmul.f32 %v2093, 1.442695
        %v2210 = vpow.pop %v2209
        %v2211 = vmul.f32 %v2094, 1.442695
        %v2212 = vpow.pop %v2211
        %v2213 = vmul.f32 %v2095, 1.442695
        %v2214 = vpow.pop %v2213
        %v2215 = vmul.f32 %v2096, 1.442695
        %v2216 = vpow.pop %v2215
        %v2217 = vmul.f32 %v2097, 1.442695
        %v2218 = vpow.pop %v2217
        %v2219 = vmul.f32 %v2098, 1.442695
        %v2220 = vpow.pop %v2219
        %v2221 = vmul.f32 %v2099, 1.442695
        %v2222 = vpow.pop %v2221
        %v2223 = vmul.f32 %v2100, 1.442695
        %v2224 = vpow.pop %v2223
        %v2225 = vmul.f32 %v2101, 1.442695
        %v2226 = vpow.pop %v2225
        %v2227 = vmul.f32 %v2102, 1.442695
        %v2228 = vpow.pop %v2227
        %v2229 = vmul.f32 %v2103, 1.442695
        %v2230 = vpow.pop %v2229
        %v2231 = vmul.f32 %v2104, 1.442695
        %v2232 = vpow.pop %v2231
        %v2233 = vadd.f32 %v1977, %v2106
        %v2234 = vadd.f32 %v1978, %v2108
        %v2235 = vadd.f32 %v1979, %v2110
        %v2236 = vadd.f32 %v1980, %v2112
        %v2237 = vadd.f32 %v1981, %v2114
        %v2238 = vadd.f32 %v1982, %v2116
        %v2239 = vadd.f32 %v1983, %v2118
        %v2240 = vadd.f32 %v1984, %v2120
        %v2241 = vadd.f32 %v1985, %v2122
        %v2242 = vadd.f32 %v1986, %v2124
        %v2243 = vadd.f32 %v1987, %v2126
        %v2244 = vadd.f32 %v1988, %v2128
        %v2245 = vadd.f32 %v1989, %v2130
        %v2246 = vadd.f32 %v1990, %v2132
        %v2247 = vadd.f32 %v1991, %v2134
        %v2248 = vadd.f32 %v1992, %v2136
        %v2249 = vadd.f32 %v1993, %v2138
        %v2250 = vadd.f32 %v1994, %v2140
        %v2251 = vadd.f32 %v1995, %v2142
        %v2252 = vadd.f32 %v1996, %v2144
        %v2253 = vadd.f32 %v1997, %v2146
        %v2254 = vadd.f32 %v1998, %v2148
        %v2255 = vadd.f32 %v1999, %v2150
        %v2256 = vadd.f32 %v2000, %v2152
        %v2257 = vadd.f32 %v2001, %v2154
        %v2258 = vadd.f32 %v2002, %v2156
        %v2259 = vadd.f32 %v2003, %v2158
        %v2260 = vadd.f32 %v2004, %v2160
        %v2261 = vadd.f32 %v2005, %v2162
        %v2262 = vadd.f32 %v2006, %v2164
        %v2263 = vadd.f32 %v2007, %v2166
        %v2264 = vadd.f32 %v2008, %v2168
        %v2265 = vadd.f32 %v2009, %v2170
        %v2266 = vadd.f32 %v2010, %v2172
        %v2267 = vadd.f32 %v2011, %v2174
        %v2268 = vadd.f32 %v2012, %v2176
        %v2269 = vadd.f32 %v2013, %v2178
        %v2270 = vadd.f32 %v2014, %v2180
        %v2271 = vadd.f32 %v2015, %v2182
        %v2272 = vadd.f32 %v2016, %v2184
        %v2273 = vadd.f32 %v2017, %v2186
        %v2274 = vadd.f32 %v2018, %v2188
        %v2275 = vadd.f32 %v2019, %v2190
        %v2276 = vadd.f32 %v2020, %v2192
        %v2277 = vadd.f32 %v2021, %v2194
        %v2278 = vadd.f32 %v2022, %v2196
        %v2279 = vadd.f32 %v2023, %v2198
        %v2280 = vadd.f32 %v2024, %v2200
        %v2281 = vadd.f32 %v2025, %v2202
        %v2282 = vadd.f32 %v2026, %v2204
        %v2283 = vadd.f32 %v2027, %v2206
        %v2284 = vadd.f32 %v2028, %v2208
        %v2285 = vadd.f32 %v2029, %v2210
        %v2286 = vadd.f32 %v2030, %v2212
        %v2287 = vadd.f32 %v2031, %v2214
        %v2288 = vadd.f32 %v2032, %v2216
        %v2289 = vadd.f32 %v2033, %v2218
        %v2290 = vadd.f32 %v2034, %v2220
        %v2291 = vadd.f32 %v2035, %v2222
        %v2292 = vadd.f32 %v2036, %v2224
        %v2293 = vadd.f32 %v2037, %v2226
        %v2294 = vadd.f32 %v2038, %v2228
        %v2295 = vadd.f32 %v2039, %v2230
        %v2296 = vadd.f32 %v2040, %v2232
        %s2297 = smul.u32 %s28, 256
        %v2298 = vlaneseq
        %v2299 = vshrl.u32 %v2298, 7
        %v2300 = vadd.s32 %v2299, 8
        %v2301 = vadd.s32 %v2299, 16
        %v2302 = vadd.s32 %v2299, 24
        %v2303 = vadd.s32 %v2299, 32
        %v2304 = vadd.s32 %v2299, 40
        %v2305 = vadd.s32 %v2299, 48
        %v2306 = vadd.s32 %v2299, 56
        %v2307 = vadd.s32 %v2299, 64
        %v2308 = vadd.s32 %v2299, 72
        %v2309 = vadd.s32 %v2299, 80
        %v2310 = vadd.s32 %v2299, 88
        %v2311 = vadd.s32 %v2299, 96
        %v2312 = vadd.s32 %v2299, 104
        %v2313 = vadd.s32 %v2299, 112
        %v2314 = vadd.s32 %v2299, 120
        %v2315 = vadd.s32 %v2299, 128
        %v2316 = vadd.s32 %v2299, 136
        %v2317 = vadd.s32 %v2299, 144
        %v2318 = vadd.s32 %v2299, 152
        %v2319 = vadd.s32 %v2299, 160
        %v2320 = vadd.s32 %v2299, 168
        %v2321 = vadd.s32 %v2299, 176
        %v2322 = vadd.s32 %v2299, 184
        %v2323 = vadd.s32 %v2299, 192
        %v2324 = vadd.s32 %v2299, 200
        %v2325 = vadd.s32 %v2299, 208
        %v2326 = vadd.s32 %v2299, 216
        %v2327 = vadd.s32 %v2299, 224
        %v2328 = vadd.s32 %v2299, 232
        %v2329 = vadd.s32 %v2299, 240
        %v2330 = vadd.s32 %v2299, 248
        %v2331 = vstv %s2297
        %v2332 = vadd.s32 %v2331, %v2299
        %v2333 = vadd.s32 %v2331, %v2300
        %v2334 = vadd.s32 %v2331, %v2301
        %v2335 = vadd.s32 %v2331, %v2302
        %v2336 = vadd.s32 %v2331, %v2303
        %v2337 = vadd.s32 %v2331, %v2304
        %v2338 = vadd.s32 %v2331, %v2305
        %v2339 = vadd.s32 %v2331, %v2306
        %v2340 = vadd.s32 %v2331, %v2307
        %v2341 = vadd.s32 %v2331, %v2308
        %v2342 = vadd.s32 %v2331, %v2309
        %v2343 = vadd.s32 %v2331, %v2310
        %v2344 = vadd.s32 %v2331, %v2311
        %v2345 = vadd.s32 %v2331, %v2312
        %v2346 = vadd.s32 %v2331, %v2313
        %v2347 = vadd.s32 %v2331, %v2314
        %v2348 = vadd.s32 %v2331, %v2315
        %v2349 = vadd.s32 %v2331, %v2316
        %v2350 = vadd.s32 %v2331, %v2317
        %v2351 = vadd.s32 %v2331, %v2318
        %v2352 = vadd.s32 %v2331, %v2319
        %v2353 = vadd.s32 %v2331, %v2320
        %v2354 = vadd.s32 %v2331, %v2321
        %v2355 = vadd.s32 %v2331, %v2322
        %v2356 = vadd.s32 %v2331, %v2323
        %v2357 = vadd.s32 %v2331, %v2324
        %v2358 = vadd.s32 %v2331, %v2325
        %v2359 = vadd.s32 %v2331, %v2326
        %v2360 = vadd.s32 %v2331, %v2327
        %v2361 = vadd.s32 %v2331, %v2328
        %v2362 = vadd.s32 %v2331, %v2329
        %v2363 = vadd.s32 %v2331, %v2330
        %s2364 = smul.u32 %s29, 256
        %v2365 = vlaneseq
        %v2366 = vand.u32 %v2365, 127
        %v2367 = vadd.s32 %v2366, 128
        %v2368 = vstv %s2364
        %v2369 = vadd.s32 %v2368, %v2366
        %v2370 = vadd.s32 %v2368, %v2367
        %vm2371 = vcmp.lt.s32.totalorder %v2332, 100
        %vm2372 = vcmp.lt.s32.totalorder %v2333, 100
        %vm2373 = vcmp.lt.s32.totalorder %v2334, 100
        %vm2374 = vcmp.lt.s32.totalorder %v2335, 100
        %vm2375 = vcmp.lt.s32.totalorder %v2336, 100
        %vm2376 = vcmp.lt.s32.totalorder %v2337, 100
        %vm2377 = vcmp.lt.s32.totalorder %v2338, 100
        %vm2378 = vcmp.lt.s32.totalorder %v2339, 100
        %vm2379 = vcmp.lt.s32.totalorder %v2340, 100
        %vm2380 = vcmp.lt.s32.totalorder %v2341, 100
        %vm2381 = vcmp.lt.s32.totalorder %v2342, 100
        %vm2382 = vcmp.lt.s32.totalorder %v2343, 100
        %vm2383 = vcmp.lt.s32.totalorder %v2344, 100
        %vm2384 = vcmp.lt.s32.totalorder %v2345, 100
        %vm2385 = vcmp.lt.s32.totalorder %v2346, 100
        %vm2386 = vcmp.lt.s32.totalorder %v2347, 100
        %vm2387 = vcmp.lt.s32.totalorder %v2348, 100
        %vm2388 = vcmp.lt.s32.totalorder %v2349, 100
        %vm2389 = vcmp.lt.s32.totalorder %v2350, 100
        %vm2390 = vcmp.lt.s32.totalorder %v2351, 100
        %vm2391 = vcmp.lt.s32.totalorder %v2352, 100
        %vm2392 = vcmp.lt.s32.totalorder %v2353, 100
        %vm2393 = vcmp.lt.s32.totalorder %v2354, 100
        %vm2394 = vcmp.lt.s32.totalorder %v2355, 100
        %vm2395 = vcmp.lt.s32.totalorder %v2356, 100
        %vm2396 = vcmp.lt.s32.totalorder %v2357, 100
        %vm2397 = vcmp.lt.s32.totalorder %v2358, 100
        %vm2398 = vcmp.lt.s32.totalorder %v2359, 100
        %vm2399 = vcmp.lt.s32.totalorder %v2360, 100
        %vm2400 = vcmp.lt.s32.totalorder %v2361, 100
        %vm2401 = vcmp.lt.s32.totalorder %v2362, 100
        %vm2402 = vcmp.lt.s32.totalorder %v2363, 100
        %vm2403 = vcmp.lt.s32.totalorder %v2332, 200
        %vm2404 = vcmp.lt.s32.totalorder %v2333, 200
        %vm2405 = vcmp.lt.s32.totalorder %v2334, 200
        %vm2406 = vcmp.lt.s32.totalorder %v2335, 200
        %vm2407 = vcmp.lt.s32.totalorder %v2336, 200
        %vm2408 = vcmp.lt.s32.totalorder %v2337, 200
        %vm2409 = vcmp.lt.s32.totalorder %v2338, 200
        %vm2410 = vcmp.lt.s32.totalorder %v2339, 200
        %vm2411 = vcmp.lt.s32.totalorder %v2340, 200
        %vm2412 = vcmp.lt.s32.totalorder %v2341, 200
        %vm2413 = vcmp.lt.s32.totalorder %v2342, 200
        %vm2414 = vcmp.lt.s32.totalorder %v2343, 200
        %vm2415 = vcmp.lt.s32.totalorder %v2344, 200
        %vm2416 = vcmp.lt.s32.totalorder %v2345, 200
        %vm2417 = vcmp.lt.s32.totalorder %v2346, 200
        %vm2418 = vcmp.lt.s32.totalorder %v2347, 200
        %vm2419 = vcmp.lt.s32.totalorder %v2348, 200
        %vm2420 = vcmp.lt.s32.totalorder %v2349, 200
        %vm2421 = vcmp.lt.s32.totalorder %v2350, 200
        %vm2422 = vcmp.lt.s32.totalorder %v2351, 200
        %vm2423 = vcmp.lt.s32.totalorder %v2352, 200
        %vm2424 = vcmp.lt.s32.totalorder %v2353, 200
        %vm2425 = vcmp.lt.s32.totalorder %v2354, 200
        %vm2426 = vcmp.lt.s32.totalorder %v2355, 200
        %vm2427 = vcmp.lt.s32.totalorder %v2356, 200
        %vm2428 = vcmp.lt.s32.totalorder %v2357, 200
        %vm2429 = vcmp.lt.s32.totalorder %v2358, 200
        %vm2430 = vcmp.lt.s32.totalorder %v2359, 200
        %vm2431 = vcmp.lt.s32.totalorder %v2360, 200
        %vm2432 = vcmp.lt.s32.totalorder %v2361, 200
        %vm2433 = vcmp.lt.s32.totalorder %v2362, 200
        %vm2434 = vcmp.lt.s32.totalorder %v2363, 200
        %v2435 = vsel %vm2403, -0.01, 0.0
        %v2436 = vsel %vm2404, -0.01, 0.0
        %v2437 = vsel %vm2405, -0.01, 0.0
        %v2438 = vsel %vm2406, -0.01, 0.0
        %v2439 = vsel %vm2407, -0.01, 0.0
        %v2440 = vsel %vm2408, -0.01, 0.0
        %v2441 = vsel %vm2409, -0.01, 0.0
        %v2442 = vsel %vm2410, -0.01, 0.0
        %v2443 = vsel %vm2411, -0.01, 0.0
        %v2444 = vsel %vm2412, -0.01, 0.0
        %v2445 = vsel %vm2413, -0.01, 0.0
        %v2446 = vsel %vm2414, -0.01, 0.0
        %v2447 = vsel %vm2415, -0.01, 0.0
        %v2448 = vsel %vm2416, -0.01, 0.0
        %v2449 = vsel %vm2417, -0.01, 0.0
        %v2450 = vsel %vm2418, -0.01, 0.0
        %v2451 = vsel %vm2419, -0.01, 0.0
        %v2452 = vsel %vm2420, -0.01, 0.0
        %v2453 = vsel %vm2421, -0.01, 0.0
        %v2454 = vsel %vm2422, -0.01, 0.0
        %v2455 = vsel %vm2423, -0.01, 0.0
        %v2456 = vsel %vm2424, -0.01, 0.0
        %v2457 = vsel %vm2425, -0.01, 0.0
        %v2458 = vsel %vm2426, -0.01, 0.0
        %v2459 = vsel %vm2427, -0.01, 0.0
        %v2460 = vsel %vm2428, -0.01, 0.0
        %v2461 = vsel %vm2429, -0.01, 0.0
        %v2462 = vsel %vm2430, -0.01, 0.0
        %v2463 = vsel %vm2431, -0.01, 0.0
        %v2464 = vsel %vm2432, -0.01, 0.0
        %v2465 = vsel %vm2433, -0.01, 0.0
        %v2466 = vsel %vm2434, -0.01, 0.0
        %v2467 = vsel %vm2371, 0.01, %v2435
        %v2468 = vsel %vm2372, 0.01, %v2436
        %v2469 = vsel %vm2373, 0.01, %v2437
        %v2470 = vsel %vm2374, 0.01, %v2438
        %v2471 = vsel %vm2375, 0.01, %v2439
        %v2472 = vsel %vm2376, 0.01, %v2440
        %v2473 = vsel %vm2377, 0.01, %v2441
        %v2474 = vsel %vm2378, 0.01, %v2442
        %v2475 = vsel %vm2379, 0.01, %v2443
        %v2476 = vsel %vm2380, 0.01, %v2444
        %v2477 = vsel %vm2381, 0.01, %v2445
        %v2478 = vsel %vm2382, 0.01, %v2446
        %v2479 = vsel %vm2383, 0.01, %v2447
        %v2480 = vsel %vm2384, 0.01, %v2448
        %v2481 = vsel %vm2385, 0.01, %v2449
        %v2482 = vsel %vm2386, 0.01, %v2450
        %v2483 = vsel %vm2387, 0.01, %v2451
        %v2484 = vsel %vm2388, 0.01, %v2452
        %v2485 = vsel %vm2389, 0.01, %v2453
        %v2486 = vsel %vm2390, 0.01, %v2454
        %v2487 = vsel %vm2391, 0.01, %v2455
        %v2488 = vsel %vm2392, 0.01, %v2456
        %v2489 = vsel %vm2393, 0.01, %v2457
        %v2490 = vsel %vm2394, 0.01, %v2458
        %v2491 = vsel %vm2395, 0.01, %v2459
        %v2492 = vsel %vm2396, 0.01, %v2460
        %v2493 = vsel %vm2397, 0.01, %v2461
        %v2494 = vsel %vm2398, 0.01, %v2462
        %v2495 = vsel %vm2399, 0.01, %v2463
        %v2496 = vsel %vm2400, 0.01, %v2464
        %v2497 = vsel %vm2401, 0.01, %v2465
        %v2498 = vsel %vm2402, 0.01, %v2466
        %vm2499 = vcmp.lt.s32.totalorder %v2369, 100
        %vm2500 = vcmp.lt.s32.totalorder %v2370, 100
        %vm2501 = vcmp.lt.s32.totalorder %v2369, 200
        %vm2502 = vcmp.lt.s32.totalorder %v2370, 200
        %v2503 = vsel %vm2501, -0.01, 0.0
        %v2504 = vsel %vm2502, -0.01, 0.0
        %v2505 = vsel %vm2499, 0.01, %v2503
        %v2506 = vsel %vm2500, 0.01, %v2504
        %v2507 = vmul.f32 %v2467, %v2505
        %v2508 = vmul.f32 %v2467, %v2506
        %v2509 = vmul.f32 %v2468, %v2505
        %v2510 = vmul.f32 %v2468, %v2506
        %v2511 = vmul.f32 %v2469, %v2505
        %v2512 = vmul.f32 %v2469, %v2506
        %v2513 = vmul.f32 %v2470, %v2505
        %v2514 = vmul.f32 %v2470, %v2506
        %v2515 = vmul.f32 %v2471, %v2505
        %v2516 = vmul.f32 %v2471, %v2506
        %v2517 = vmul.f32 %v2472, %v2505
        %v2518 = vmul.f32 %v2472, %v2506
        %v2519 = vmul.f32 %v2473, %v2505
        %v2520 = vmul.f32 %v2473, %v2506
        %v2521 = vmul.f32 %v2474, %v2505
        %v2522 = vmul.f32 %v2474, %v2506
        %v2523 = vmul.f32 %v2475, %v2505
        %v2524 = vmul.f32 %v2475, %v2506
        %v2525 = vmul.f32 %v2476, %v2505
        %v2526 = vmul.f32 %v2476, %v2506
        %v2527 = vmul.f32 %v2477, %v2505
        %v2528 = vmul.f32 %v2477, %v2506
        %v2529 = vmul.f32 %v2478, %v2505
        %v2530 = vmul.f32 %v2478, %v2506
        %v2531 = vmul.f32 %v2479, %v2505
        %v2532 = vmul.f32 %v2479, %v2506
        %v2533 = vmul.f32 %v2480, %v2505
        %v2534 = vmul.f32 %v2480, %v2506
        %v2535 = vmul.f32 %v2481, %v2505
        %v2536 = vmul.f32 %v2481, %v2506
        %v2537 = vmul.f32 %v2482, %v2505
        %v2538 = vmul.f32 %v2482, %v2506
        %v2539 = vmul.f32 %v2483, %v2505
        %v2540 = vmul.f32 %v2483, %v2506
        %v2541 = vmul.f32 %v2484, %v2505
        %v2542 = vmul.f32 %v2484, %v2506
        %v2543 = vmul.f32 %v2485, %v2505
        %v2544 = vmul.f32 %v2485, %v2506
        %v2545 = vmul.f32 %v2486, %v2505
        %v2546 = vmul.f32 %v2486, %v2506
        %v2547 = vmul.f32 %v2487, %v2505
        %v2548 = vmul.f32 %v2487, %v2506
        %v2549 = vmul.f32 %v2488, %v2505
        %v2550 = vmul.f32 %v2488, %v2506
        %v2551 = vmul.f32 %v2489, %v2505
        %v2552 = vmul.f32 %v2489, %v2506
        %v2553 = vmul.f32 %v2490, %v2505
        %v2554 = vmul.f32 %v2490, %v2506
        %v2555 = vmul.f32 %v2491, %v2505
        %v2556 = vmul.f32 %v2491, %v2506
        %v2557 = vmul.f32 %v2492, %v2505
        %v2558 = vmul.f32 %v2492, %v2506
        %v2559 = vmul.f32 %v2493, %v2505
        %v2560 = vmul.f32 %v2493, %v2506
        %v2561 = vmul.f32 %v2494, %v2505
        %v2562 = vmul.f32 %v2494, %v2506
        %v2563 = vmul.f32 %v2495, %v2505
        %v2564 = vmul.f32 %v2495, %v2506
        %v2565 = vmul.f32 %v2496, %v2505
        %v2566 = vmul.f32 %v2496, %v2506
        %v2567 = vmul.f32 %v2497, %v2505
        %v2568 = vmul.f32 %v2497, %v2506
        %v2569 = vmul.f32 %v2498, %v2505
        %v2570 = vmul.f32 %v2498, %v2506
        %v2571 = vmul.f32 %v2233, %v2507
        %v2572 = vmul.f32 %v2234, %v2508
        %v2573 = vmul.f32 %v2235, %v2509
        %v2574 = vmul.f32 %v2236, %v2510
        %v2575 = vmul.f32 %v2237, %v2511
        %v2576 = vmul.f32 %v2238, %v2512
        %v2577 = vmul.f32 %v2239, %v2513
        %v2578 = vmul.f32 %v2240, %v2514
        %v2579 = vmul.f32 %v2241, %v2515
        %v2580 = vmul.f32 %v2242, %v2516
        %v2581 = vmul.f32 %v2243, %v2517
        %v2582 = vmul.f32 %v2244, %v2518
        %v2583 = vmul.f32 %v2245, %v2519
        %v2584 = vmul.f32 %v2246, %v2520
        %v2585 = vmul.f32 %v2247, %v2521
        %v2586 = vmul.f32 %v2248, %v2522
        %v2587 = vmul.f32 %v2249, %v2523
        %v2588 = vmul.f32 %v2250, %v2524
        %v2589 = vmul.f32 %v2251, %v2525
        %v2590 = vmul.f32 %v2252, %v2526
        %v2591 = vmul.f32 %v2253, %v2527
        %v2592 = vmul.f32 %v2254, %v2528
        %v2593 = vmul.f32 %v2255, %v2529
        %v2594 = vmul.f32 %v2256, %v2530
        %v2595 = vmul.f32 %v2257, %v2531
        %v2596 = vmul.f32 %v2258, %v2532
        %v2597 = vmul.f32 %v2259, %v2533
        %v2598 = vmul.f32 %v2260, %v2534
        %v2599 = vmul.f32 %v2261, %v2535
        %v2600 = vmul.f32 %v2262, %v2536
        %v2601 = vmul.f32 %v2263, %v2537
        %v2602 = vmul.f32 %v2264, %v2538
        %v2603 = vmul.f32 %v2265, %v2539
        %v2604 = vmul.f32 %v2266, %v2540
        %v2605 = vmul.f32 %v2267, %v2541
        %v2606 = vmul.f32 %v2268, %v2542
        %v2607 = vmul.f32 %v2269, %v2543
        %v2608 = vmul.f32 %v2270, %v2544
        %v2609 = vmul.f32 %v2271, %v2545
        %v2610 = vmul.f32 %v2272, %v2546
        %v2611 = vmul.f32 %v2273, %v2547
        %v2612 = vmul.f32 %v2274, %v2548
        %v2613 = vmul.f32 %v2275, %v2549
        %v2614 = vmul.f32 %v2276, %v2550
        %v2615 = vmul.f32 %v2277, %v2551
        %v2616 = vmul.f32 %v2278, %v2552
        %v2617 = vmul.f32 %v2279, %v2553
        %v2618 = vmul.f32 %v2280, %v2554
        %v2619 = vmul.f32 %v2281, %v2555
        %v2620 = vmul.f32 %v2282, %v2556
        %v2621 = vmul.f32 %v2283, %v2557
        %v2622 = vmul.f32 %v2284, %v2558
        %v2623 = vmul.f32 %v2285, %v2559
        %v2624 = vmul.f32 %v2286, %v2560
        %v2625 = vmul.f32 %v2287, %v2561
        %v2626 = vmul.f32 %v2288, %v2562
        %v2627 = vmul.f32 %v2289, %v2563
        %v2628 = vmul.f32 %v2290, %v2564
        %v2629 = vmul.f32 %v2291, %v2565
        %v2630 = vmul.f32 %v2292, %v2566
        %v2631 = vmul.f32 %v2293, %v2567
        %v2632 = vmul.f32 %v2294, %v2568
        %v2633 = vmul.f32 %v2295, %v2569
        %v2634 = vmul.f32 %v2296, %v2570
        %v2635 = vadd.f32 %v2571, %v2572
        %v2636 = vadd.f32 %v2635, %v2573
        %v2637 = vadd.f32 %v2636, %v2574
        %v2638 = vadd.f32 %v2637, %v2575
        %v2639 = vadd.f32 %v2638, %v2576
        %v2640 = vadd.f32 %v2639, %v2577
        %v2641 = vadd.f32 %v2640, %v2578
        %v2642 = vadd.f32 %v2641, %v2579
        %v2643 = vadd.f32 %v2642, %v2580
        %v2644 = vadd.f32 %v2643, %v2581
        %v2645 = vadd.f32 %v2644, %v2582
        %v2646 = vadd.f32 %v2645, %v2583
        %v2647 = vadd.f32 %v2646, %v2584
        %v2648 = vadd.f32 %v2647, %v2585
        %v2649 = vadd.f32 %v2648, %v2586
        %v2650 = vadd.f32 %v2649, %v2587
        %v2651 = vadd.f32 %v2650, %v2588
        %v2652 = vadd.f32 %v2651, %v2589
        %v2653 = vadd.f32 %v2652, %v2590
        %v2654 = vadd.f32 %v2653, %v2591
        %v2655 = vadd.f32 %v2654, %v2592
        %v2656 = vadd.f32 %v2655, %v2593
        %v2657 = vadd.f32 %v2656, %v2594
        %v2658 = vadd.f32 %v2657, %v2595
        %v2659 = vadd.f32 %v2658, %v2596
        %v2660 = vadd.f32 %v2659, %v2597
        %v2661 = vadd.f32 %v2660, %v2598
        %v2662 = vadd.f32 %v2661, %v2599
        %v2663 = vadd.f32 %v2662, %v2600
        %v2664 = vadd.f32 %v2663, %v2601
        %v2665 = vadd.f32 %v2664, %v2602
        %v2666 = vadd.f32 %v2665, %v2603
        %v2667 = vadd.f32 %v2666, %v2604
        %v2668 = vadd.f32 %v2667, %v2605
        %v2669 = vadd.f32 %v2668, %v2606
        %v2670 = vadd.f32 %v2669, %v2607
        %v2671 = vadd.f32 %v2670, %v2608
        %v2672 = vadd.f32 %v2671, %v2609
        %v2673 = vadd.f32 %v2672, %v2610
        %v2674 = vadd.f32 %v2673, %v2611
        %v2675 = vadd.f32 %v2674, %v2612
        %v2676 = vadd.f32 %v2675, %v2613
        %v2677 = vadd.f32 %v2676, %v2614
        %v2678 = vadd.f32 %v2677, %v2615
        %v2679 = vadd.f32 %v2678, %v2616
        %v2680 = vadd.f32 %v2679, %v2617
        %v2681 = vadd.f32 %v2680, %v2618
        %v2682 = vadd.f32 %v2681, %v2619
        %v2683 = vadd.f32 %v2682, %v2620
        %v2684 = vadd.f32 %v2683, %v2621
        %v2685 = vadd.f32 %v2684, %v2622
        %v2686 = vadd.f32 %v2685, %v2623
        %v2687 = vadd.f32 %v2686, %v2624
        %v2688 = vadd.f32 %v2687, %v2625
        %v2689 = vadd.f32 %v2688, %v2626
        %v2690 = vadd.f32 %v2689, %v2627
        %v2691 = vadd.f32 %v2690, %v2628
        %v2692 = vadd.f32 %v2691, %v2629
        %v2693 = vadd.f32 %v2692, %v2630
        %v2694 = vadd.f32 %v2693, %v2631
        %v2695 = vadd.f32 %v2694, %v2632
        %v2696 = vadd.f32 %v2695, %v2633
        %v2697 = vadd.f32 %v2696, %v2634
        %2698 = vadd.xlane.f32.xlu0 %v2697
        %v2699 = vpop.xlane.xlu0 %2698
        %v2700 = vrot.slane %v2699, 4
        %v2701 = vadd.f32 %v2699, %v2700
        %v2702 = vrot.slane %v2701, 2
        %v2703 = vadd.f32 %v2701, %v2702
        %v2704 = vrot.slane %v2703, 1
        %v2705 = vadd.f32 %v2703, %v2704
        %s2706 = vtos %v2705
        %v2707 = vld [vmem:[#allocation2] sm:$0xff]
        %v2708 = vstv %s2706
        %v2709 = vadd.f32 %v2707, %v2708
        %2710 = vst [vmem:[#allocation2] sm:$0xff] %v2709
        // Predicated region
        $region41: #{tpu_custom_call.1} parent=27 // pred_check
          _
        $region42: #{tpu_custom_call.1} parent=27 // pred_check_branch
          %2712 = sbr.rel (%p235) target = $region44
        $region43: #{tpu_custom_call.1} parent=27 // pred_region
          %v2713 = vld [vmem:[#allocation2] sm:$0xff]
          %2714 = vst [vmem:[%s230] sm:$0xff] %v2713
        $region44: #{tpu_custom_call.1} parent=27 // pred_fallthru
          _
        %s2715 = sand.u32 %s105, 1
        %s2716 = scalar_lea.sflag [#allocation5], %s2715
        %s2717 = sand.u32 %s105, 1
        %s2718 = smul.addr %s2717, 8
        %s2719 = scalar_lea.vmem [#allocation8], %s2718
        // Predicated region
        $region45: #{tpu_custom_call.1} parent=27 // pred_check
          %p2720 = pneg %p115
        $region46: #{tpu_custom_call.1} parent=27 // pred_check_branch
          %2722 = sbr.rel (%p2720) target = $region48
        $region47: #{tpu_custom_call.1} parent=27 // pred_region
          %s2724 = ssub.s32 128, 128
          %2725 = vsyncadd %s2716, %s2724
          %s2726 = smul.addr %s27, 128
          %s2727 = scalar_lea.hbm %s2, %s2726
          %s2729 = sshll.u32 %s2719, 4
          %s2730 = int_to_ptr.vmem [resolvable:$true] %s2729
          %2732 = dma.vmem_to_hbm [thread:$0]  %s2730, 128, %s2727, %s2716
        $region48: #{tpu_custom_call.1} parent=27 // pred_fallthru
          _
      $region28: #{tpu_custom_call.1} parent=5 // pred_fallthru
        _
      %p2733 = scmp.le.s32.totalorder 2, %s17
      // Predicated region
      $region49: #{tpu_custom_call.1} parent=5 // pred_check
        %p2734 = pneg %p2733
      $region50: #{tpu_custom_call.1} parent=5 // pred_check_branch
        %2736 = sbr.rel (%p2734) target = $region52
      $region51: #{tpu_custom_call.1} parent=5 // pred_region
        %s2737 = ssub.s32 %s17, 2
        // Predicated region
        $region53: #{tpu_custom_call.1} parent=51 // pred_check
          %p2738 = pneg %p121
        $region54: #{tpu_custom_call.1} parent=51 // pred_check_branch
          %2740 = sbr.rel (%p2738) target = $region56
        $region55: #{tpu_custom_call.1} parent=51 // pred_region
          %s2741 = sand.u32 %s106, 1
          %s2742 = scalar_lea.sflag [#allocation5], %s2741
          %s2743 = sand.u32 %s106, 1
          %s2744 = smul.addr %s2743, 8
          %s2745 = scalar_lea.vmem [#allocation8], %s2744
          %2746 = dma.done %s2742, 128
        $region56: #{tpu_custom_call.1} parent=51 // pred_fallthru
          _
      $region52: #{tpu_custom_call.1} parent=5 // pred_fallthru
        _
    $region6: #{tpu_custom_call.1} parent=1 // loop_footer
      %s21 = sadd.s32 1, %s17
    $region7: #{tpu_custom_call.1} parent=1 // loop_footer_branch
      %16 = sbr.rel target = $region3
    $region8: #{tpu_custom_call.1} parent=1 // loop_exit
      _
    %2747 = vsyncpa [#allocation4], 1
    %s2748 = scalar_lea.sflag [#allocation4], 1
    %2749 = vsyncpa %s2748, 1
    %2750 = vsyncpa [#allocation7], 1
    %s2751 = scalar_lea.sflag [#allocation7], 1
    %2752 = vsyncpa %s2751, 1
    %2753 = vsyncpa [#allocation5], 1
    %s2754 = scalar_lea.sflag [#allocation5], 1
    %2755 = vsyncpa %s2754, 1

</llo_original>
